<compile_context>
chip_gen: v5e
topology: v5e:2x2
jax: 0.10.0
libtpu: 0.0.40
codegen_flags: <defaults>
</compile_context>

<pallas_src>
import jax
import jax.numpy as jnp
import numpy as np
from jax.experimental import pallas as pl
from jax.experimental.pallas import tpu as pltpu

HIDDEN_SIZE = 128
BN_EPS = 1e-5
DEFAULT_B_TILE = 256      # v6e/v7x; TODO(synk): prefer bt=128 on v5e
UNROLL_T_MAX = 16


def _round_up(n, m):
    return ((n + m - 1) // m) * m


def lstm_classifier_kernel(x_ref, waug_ref, weff_ref, beff_ref, out_ref):
    # x_ref:    (Bt, T)  f32   (input_size == 1 squeezed out)
    # waug_ref: (K, 4H)  bf16  rows [0:H]=W_hh^T, [H]=w_ih^T, [H+1]=b_ih+b_hh, rest 0;
    #                          gate columns permuted to [i, f, o, g]
    # weff_ref: (1, H)   f32   fc.weight folded with BatchNorm(eval) scale
    # beff_ref: (1, 1)   f32   fc.bias folded with BatchNorm(eval) shift
    # out_ref:  (Bt, 1)  f32
    Bt, T = x_ref.shape
    K, H4 = waug_ref.shape
    H = H4 // 4
    tail_w = K - H                                     # x / ones / zero-pad lanes

    waug = waug_ref[...]                               # (K, 4H) bf16, VMEM-resident
    x_bf = x_ref[...].astype(jnp.bfloat16)             # (Bt, T)

    # Loop-invariant tail pieces (hoisted: JAX does not CSE broadcast_in_dim).
    lane = jax.lax.broadcasted_iota(jnp.int32, (Bt, tail_w), 1)
    base_tail = jnp.where(lane == 1, 1.0, 0.0).astype(jnp.bfloat16)   # ones at lane 1

    def step(x_col, h_bf, c):
        # x_col: (Bt, 1) bf16 input at this timestep.
        tail = jnp.where(lane == 0, x_col, base_tail)            # (Bt, K-H) bf16
        h_aug = jnp.concatenate([h_bf, tail], axis=-1)           # (Bt, K)   bf16
        # Single MXU pass per step: h@W_hh^T + x*w_ih^T + (b_ih+b_hh), f32 accumulate.
        gates = jnp.dot(h_aug, waug, preferred_element_type=jnp.float32)   # (Bt, 4H)
        gb = gates.astype(jnp.bfloat16)
        # Gate order [i, f, o, g]: one fused sigmoid over 3H, one tanh over H (bf16 EUP).
        sig = jax.nn.sigmoid(gb[:, :3 * H])
        g_g = jnp.tanh(gb[:, 3 * H:])
        i_g = sig[:, :H]
        f_g = sig[:, H:2 * H]
        o_g = sig[:, 2 * H:]
        c_new = (f_g.astype(jnp.float32) * c
                 + i_g.astype(jnp.float32) * g_g.astype(jnp.float32))      # f32 cell
        tanh_c = jnp.tanh(c_new)                                           # f32
        h_new = o_g * tanh_c.astype(jnp.bfloat16)                          # bf16 carry
        return h_new, c_new, o_g, tanh_c

    h_bf = jnp.zeros((Bt, H), jnp.bfloat16)
    c = jnp.zeros((Bt, H), jnp.float32)

    if T <= UNROLL_T_MAX:
        # Small static T: fully unrolled recurrence (LLO scheduler visibility).
        o_g = jnp.zeros((Bt, H), jnp.bfloat16)
        tanh_c = jnp.zeros((Bt, H), jnp.float32)
        for t in range(T):
            h_bf, c, o_g, tanh_c = step(x_bf[:, t:t + 1], h_bf, c)
        # f32 last hidden state for the epilogue (computed once, off the serial chain).
        h_last = o_g.astype(jnp.float32) * tanh_c
    else:
        # Larger T: bound live ranges / code size with a rolled loop.
        def body(t, carry):
            hb, cc = carry
            x_col = jax.lax.dynamic_slice_in_dim(x_bf, t, 1, axis=1)
            hb, cc, _, _ = step(x_col, hb, cc)
            return (hb, cc)
        h_bf, c = jax.lax.fori_loop(0, T, body, (h_bf, c), unroll=2)
        h_last = h_bf.astype(jnp.float32)
        # TODO(synk): keep an exact f32 h on the final fori step instead of upcasting.

    # BatchNorm(eval) + Dropout(eval=identity) + Linear(H, 1), pre-folded into
    # (w_eff, b_eff); N=1 output -> VPU multiply + lane reduce, no 1-column MXU pass.
    # TODO(synk): lane-dense (1, Bt) output block (transpose the (Bt,1) reduction) to
    #             avoid the masked single-lane store on writeback.
    # TODO(synk): hold W_aug staged in the MXU across the loop via
    #             pltpu.matmul_push_rhs / matmul_acc_lhs / matmul_pop.
    out_ref[...] = (jnp.sum(h_last * weff_ref[...], axis=-1, keepdims=True)
                    + beff_ref[...])


def lstm_classifier_forward(x, params, *, b_tile=DEFAULT_B_TILE):
    """x: (B, T, 1) float32.  Returns (B,) float32 (matches .squeeze(1))."""
    w_ih, w_hh, b_ih, b_hh, gamma, beta, rmean, rvar, fc_w, fc_b = params
    B, T, I = x.shape
    assert I == 1, "module was built with input_size=1"
    H = w_hh.shape[1]
    H4 = 4 * H

    # Permute PyTorch gate order [i, f, g, o] -> [i, f, o, g] (fused sigmoid over 3H).
    perm = np.concatenate([np.arange(0, 2 * H),
                           np.arange(3 * H, 4 * H),
                           np.arange(2 * H, 3 * H)])

    # Augmented recurrent weight: rows [0:H] = W_hh^T, [H] = w_ih^T, [H+1] = b_ih+b_hh,
    # zero-padded to a multiple of 128 (K=256 for H=128 fills the v6e/v7x 256-row MXU).
    # TODO(synk): v5e-specific variant: keep K=128 with an x/bias hoist and f32 gates.
    K = _round_up(H + 2, 128)
    waug = jnp.zeros((K, H4), jnp.float32)
    waug = waug.at[:H, :].set(jnp.asarray(w_hh, jnp.float32).T[:, perm])
    waug = waug.at[H, :].set(jnp.asarray(w_ih, jnp.float32).reshape(H4)[perm])
    waug = waug.at[H + 1, :].set((jnp.asarray(b_ih, jnp.float32)
                                  + jnp.asarray(b_hh, jnp.float32))[perm])
    waug = waug.astype(jnp.bfloat16)

    # Fold BatchNorm1d(eval) into the final Linear: out = sum(h * w_eff) + b_eff.
    inv_std = jax.lax.rsqrt(jnp.asarray(rvar, jnp.float32) + BN_EPS)
    scale = jnp.asarray(gamma, jnp.float32) * inv_std                    # (H,)
    fcw = jnp.asarray(fc_w, jnp.float32).reshape(H)
    w_eff = (fcw * scale).reshape(1, H)
    b_eff = (jnp.asarray(fc_b, jnp.float32).reshape(())
             + jnp.sum(fcw * (jnp.asarray(beta, jnp.float32)
                              - jnp.asarray(rmean, jnp.float32) * scale))
             ).reshape(1, 1)

    # Batch tiling: tile is a multiple of 8 and gives >= 2 tiles whenever B > 8,
    # so both v7x TensorCores get work under dimension_semantics=("parallel",).
    bt = min(b_tile, max(8, _round_up((B + 1) // 2, 8)))
    B_pad = _round_up(B, bt)
    x2 = x.reshape(B, T).astype(jnp.float32)
    if B_pad != B:
        x2 = jnp.pad(x2, ((0, B_pad - B), (0, 0)))

    const = lambda i: (0, 0)
    out = pl.pallas_call(
        lstm_classifier_kernel,
        out_shape=jax.ShapeDtypeStruct((B_pad, 1), jnp.float32),
        grid=(B_pad // bt,),
        in_specs=[
            pl.BlockSpec((bt, T), lambda i: (i, 0)),   # x: tiled over batch
            pl.BlockSpec((K, H4), const),              # W_aug (VMEM-resident, bf16)
            pl.BlockSpec((1, H), const),               # w_eff (BN folded into FC)
            pl.BlockSpec((1, 1), const),               # b_eff
        ],
        out_specs=pl.BlockSpec((bt, 1), lambda i: (i, 0)),
        compiler_params=pltpu.CompilerParams(
            dimension_semantics=("parallel",)),
    )(x2, waug, w_eff, b_eff)
    return out[:B, 0]


def init_params(key, hidden_size=HIDDEN_SIZE, input_size=1):
    """Deterministic init matching the PyTorch module's parameter shapes/defaults."""
    k_lstm = 1.0 / jnp.sqrt(jnp.float32(hidden_size))
    k_fc = 1.0 / jnp.sqrt(jnp.float32(hidden_size))
    ks = jax.random.split(key, 6)
    w_ih = jax.random.uniform(ks[0], (4 * hidden_size, input_size), jnp.float32, -k_lstm, k_lstm)
    w_hh = jax.random.uniform(ks[1], (4 * hidden_size, hidden_size), jnp.float32, -k_lstm, k_lstm)
    b_ih = jax.random.uniform(ks[2], (4 * hidden_size,), jnp.float32, -k_lstm, k_lstm)
    b_hh = jax.random.uniform(ks[3], (4 * hidden_size,), jnp.float32, -k_lstm, k_lstm)
    # BatchNorm1d fresh init: weight=1, bias=0, running_mean=0, running_var=1
    gamma = jnp.ones((hidden_size,), jnp.float32)
    beta = jnp.zeros((hidden_size,), jnp.float32)
    rmean = jnp.zeros((hidden_size,), jnp.float32)
    rvar = jnp.ones((hidden_size,), jnp.float32)
    fc_w = jax.random.uniform(ks[4], (1, hidden_size), jnp.float32, -k_fc, k_fc)
    fc_b = jax.random.uniform(ks[5], (1,), jnp.float32, -k_fc, k_fc)
    return (w_ih, w_hh, b_ih, b_hh, gamma, beta, rmean, rvar, fc_w, fc_b)


if __name__ == "__main__":
    key = jax.random.PRNGKey(0)
    k_param, k_x = jax.random.split(key)

    B, T = 2, 8
    params = init_params(k_param)
    x = jax.random.normal(k_x, (B, T, 1), jnp.float32)

    out = lstm_classifier_forward(x, params)
    out = jax.block_until_ready(out)

    assert out.shape == (B,), out.shape
    assert bool(jnp.all(jnp.isfinite(out)))
    print("KERNEL_OK")
</pallas_src>

<mosaic_0001>
module attributes {stable_mosaic.version = 11 : i64} {
  func.func @lstm_classifier_kernel(%arg0: i32, %arg1: memref<8x8xf32, #tpu.memory_space<vmem>>, %arg2: memref<256x512xbf16, #tpu.memory_space<vmem>>, %arg3: memref<1x128xf32, #tpu.memory_space<vmem>>, %arg4: memref<1x1xf32, #tpu.memory_space<vmem>>, %arg5: memref<8x1xf32, #tpu.memory_space<vmem>>) attributes {dimension_semantics = [#tpu.dimension_semantics<parallel>], iteration_bounds = array<i64: 1>, scalar_prefetch = 0 : i64, scratch_operands = 0 : i64, tpu.core_type = #tpu.core_type<tc>, window_params = [{transform_indices = @transform_0, window_bounds = array<i64: 8, 8>}, {pipeline_mode = #tpu.pipeline_mode<synchronous>, transform_indices = @transform_1, window_bounds = array<i64: 256, 512>}, {pipeline_mode = #tpu.pipeline_mode<synchronous>, transform_indices = @transform_2, window_bounds = array<i64: 1, 128>}, {pipeline_mode = #tpu.pipeline_mode<synchronous>, transform_indices = @transform_3, window_bounds = array<i64: 1, 1>}, {transform_indices = @transform_4, window_bounds = array<i64: 8, 1>}]} {
    %c0 = arith.constant 0 : index
    %c0_0 = arith.constant 0 : index
    %0 = vector.load %arg2[%c0, %c0_0] : memref<256x512xbf16, #tpu.memory_space<vmem>>, vector<256x512xbf16>
    %c0_1 = arith.constant 0 : index
    %c0_2 = arith.constant 0 : index
    %1 = vector.load %arg1[%c0_1, %c0_2] : memref<8x8xf32, #tpu.memory_space<vmem>>, vector<8x8xf32>
    %2 = arith.truncf %1 : vector<8x8xf32> to vector<8x8xbf16>
    %3 = tpu.iota {dimensions = array<i32: 1>} : vector<8x128xi32>
    %c1_i32 = arith.constant 1 : i32
    %4 = vector.broadcast %c1_i32 : i32 to vector<8x128xi32>
    %5 = arith.cmpi eq, %3, %4 : vector<8x128xi32>
    %cst = arith.constant 1.000000e+00 : f32
    %cst_3 = arith.constant 0.000000e+00 : f32
    %6 = vector.broadcast %cst : f32 to vector<8x128xf32>
    %7 = vector.broadcast %cst_3 : f32 to vector<8x128xf32>
    %8 = arith.select %5, %6, %7 : vector<8x128xi1>, vector<8x128xf32>
    %9 = arith.truncf %8 : vector<8x128xf32> to vector<8x128xbf16>
    %cst_4 = arith.constant 0.000000e+00 : bf16
    %10 = vector.broadcast %cst_4 : bf16 to vector<8x128xbf16>
    %cst_5 = arith.constant 0.000000e+00 : f32
    %11 = vector.broadcast %cst_5 : f32 to vector<8x128xf32>
    %12 = vector.extract_strided_slice %2 {offsets = [0, 0], sizes = [8, 1], strides = [1, 1]} : vector<8x8xbf16> to vector<8x1xbf16>
    %c0_i32 = arith.constant 0 : i32
    %13 = vector.broadcast %c0_i32 : i32 to vector<8x128xi32>
    %14 = arith.cmpi eq, %3, %13 : vector<8x128xi32>
    %15 = vector.shape_cast %12 : vector<8x1xbf16> to vector<8x1xbf16>
    %16 = vector.broadcast %15 : vector<8x1xbf16> to vector<8x128xbf16>
    %17 = arith.select %14, %16, %9 : vector<8x128xi1>, vector<8x128xbf16>
    %18 = tpu.concatenate %10, %17 in 1 : vector<8x128xbf16>, vector<8x128xbf16> -> vector<8x256xbf16>
    %cst_6 = arith.constant dense<0.000000e+00> : vector<8x512xf32>
    %19 = tpu.matmul %18, %0, %cst_6 {dimension_numbers = #tpu.dot_dimension_numbers<[1], [0], [0], [1], [0, 0, 1, 1], [], []>} : vector<8x256xbf16>, vector<256x512xbf16>, vector<8x512xf32> -> vector<8x512xf32>
    %20 = arith.truncf %19 : vector<8x512xf32> to vector<8x512xbf16>
    %21 = vector.extract_strided_slice %20 {offsets = [0, 0], sizes = [8, 384], strides = [1, 1]} : vector<8x512xbf16> to vector<8x384xbf16>
    %22 = arith.negf %21 : vector<8x384xbf16>
    %23 = math.exp %22 : vector<8x384xbf16>
    %cst_7 = arith.constant 1.000000e+00 : bf16
    %24 = vector.broadcast %cst_7 : bf16 to vector<8x384xbf16>
    %25 = arith.addf %24, %23 : vector<8x384xbf16>
    %26 = arith.divf %24, %25 : vector<8x384xbf16>
    %27 = vector.extract_strided_slice %20 {offsets = [0, 384], sizes = [8, 128], strides = [1, 1]} : vector<8x512xbf16> to vector<8x128xbf16>
    %28 = math.tanh %27 : vector<8x128xbf16>
    %29 = vector.extract_strided_slice %26 {offsets = [0, 0], sizes = [8, 128], strides = [1, 1]} : vector<8x384xbf16> to vector<8x128xbf16>
    %30 = vector.extract_strided_slice %26 {offsets = [0, 128], sizes = [8, 128], strides = [1, 1]} : vector<8x384xbf16> to vector<8x128xbf16>
    %31 = vector.extract_strided_slice %26 {offsets = [0, 256], sizes = [8, 128], strides = [1, 1]} : vector<8x384xbf16> to vector<8x128xbf16>
    %32 = arith.extf %30 : vector<8x128xbf16> to vector<8x128xf32>
    %33 = arith.mulf %32, %11 : vector<8x128xf32>
    %34 = arith.extf %29 : vector<8x128xbf16> to vector<8x128xf32>
    %35 = arith.extf %28 : vector<8x128xbf16> to vector<8x128xf32>
    %36 = arith.mulf %34, %35 : vector<8x128xf32>
    %37 = arith.addf %33, %36 : vector<8x128xf32>
    %38 = math.tanh %37 : vector<8x128xf32>
    %39 = arith.truncf %38 : vector<8x128xf32> to vector<8x128xbf16>
    %40 = arith.mulf %31, %39 : vector<8x128xbf16>
    %41 = vector.extract_strided_slice %2 {offsets = [0, 1], sizes = [8, 1], strides = [1, 1]} : vector<8x8xbf16> to vector<8x1xbf16>
    %c0_i32_8 = arith.constant 0 : i32
    %42 = vector.broadcast %c0_i32_8 : i32 to vector<8x128xi32>
    %43 = arith.cmpi eq, %3, %42 : vector<8x128xi32>
    %44 = vector.shape_cast %41 : vector<8x1xbf16> to vector<8x1xbf16>
    %45 = vector.broadcast %44 : vector<8x1xbf16> to vector<8x128xbf16>
    %46 = arith.select %43, %45, %9 : vector<8x128xi1>, vector<8x128xbf16>
    %47 = tpu.concatenate %40, %46 in 1 : vector<8x128xbf16>, vector<8x128xbf16> -> vector<8x256xbf16>
    %cst_9 = arith.constant dense<0.000000e+00> : vector<8x512xf32>
    %48 = tpu.matmul %47, %0, %cst_9 {dimension_numbers = #tpu.dot_dimension_numbers<[1], [0], [0], [1], [0, 0, 1, 1], [], []>} : vector<8x256xbf16>, vector<256x512xbf16>, vector<8x512xf32> -> vector<8x512xf32>
    %49 = arith.truncf %48 : vector<8x512xf32> to vector<8x512xbf16>
    %50 = vector.extract_strided_slice %49 {offsets = [0, 0], sizes = [8, 384], strides = [1, 1]} : vector<8x512xbf16> to vector<8x384xbf16>
    %51 = arith.negf %50 : vector<8x384xbf16>
    %52 = math.exp %51 : vector<8x384xbf16>
    %cst_10 = arith.constant 1.000000e+00 : bf16
    %53 = vector.broadcast %cst_10 : bf16 to vector<8x384xbf16>
    %54 = arith.addf %53, %52 : vector<8x384xbf16>
    %55 = arith.divf %53, %54 : vector<8x384xbf16>
    %56 = vector.extract_strided_slice %49 {offsets = [0, 384], sizes = [8, 128], strides = [1, 1]} : vector<8x512xbf16> to vector<8x128xbf16>
    %57 = math.tanh %56 : vector<8x128xbf16>
    %58 = vector.extract_strided_slice %55 {offsets = [0, 0], sizes = [8, 128], strides = [1, 1]} : vector<8x384xbf16> to vector<8x128xbf16>
    %59 = vector.extract_strided_slice %55 {offsets = [0, 128], sizes = [8, 128], strides = [1, 1]} : vector<8x384xbf16> to vector<8x128xbf16>
    %60 = vector.extract_strided_slice %55 {offsets = [0, 256], sizes = [8, 128], strides = [1, 1]} : vector<8x384xbf16> to vector<8x128xbf16>
    %61 = arith.extf %59 : vector<8x128xbf16> to vector<8x128xf32>
    %62 = arith.mulf %61, %37 : vector<8x128xf32>
    %63 = arith.extf %58 : vector<8x128xbf16> to vector<8x128xf32>
    %64 = arith.extf %57 : vector<8x128xbf16> to vector<8x128xf32>
    %65 = arith.mulf %63, %64 : vector<8x128xf32>
    %66 = arith.addf %62, %65 : vector<8x128xf32>
    %67 = math.tanh %66 : vector<8x128xf32>
    %68 = arith.truncf %67 : vector<8x128xf32> to vector<8x128xbf16>
    %69 = arith.mulf %60, %68 : vector<8x128xbf16>
    %70 = vector.extract_strided_slice %2 {offsets = [0, 2], sizes = [8, 1], strides = [1, 1]} : vector<8x8xbf16> to vector<8x1xbf16>
    %c0_i32_11 = arith.constant 0 : i32
    %71 = vector.broadcast %c0_i32_11 : i32 to vector<8x128xi32>
    %72 = arith.cmpi eq, %3, %71 : vector<8x128xi32>
    %73 = vector.shape_cast %70 : vector<8x1xbf16> to vector<8x1xbf16>
    %74 = vector.broadcast %73 : vector<8x1xbf16> to vector<8x128xbf16>
    %75 = arith.select %72, %74, %9 : vector<8x128xi1>, vector<8x128xbf16>
    %76 = tpu.concatenate %69, %75 in 1 : vector<8x128xbf16>, vector<8x128xbf16> -> vector<8x256xbf16>
    %cst_12 = arith.constant dense<0.000000e+00> : vector<8x512xf32>
    %77 = tpu.matmul %76, %0, %cst_12 {dimension_numbers = #tpu.dot_dimension_numbers<[1], [0], [0], [1], [0, 0, 1, 1], [], []>} : vector<8x256xbf16>, vector<256x512xbf16>, vector<8x512xf32> -> vector<8x512xf32>
    %78 = arith.truncf %77 : vector<8x512xf32> to vector<8x512xbf16>
    %79 = vector.extract_strided_slice %78 {offsets = [0, 0], sizes = [8, 384], strides = [1, 1]} : vector<8x512xbf16> to vector<8x384xbf16>
    %80 = arith.negf %79 : vector<8x384xbf16>
    %81 = math.exp %80 : vector<8x384xbf16>
    %cst_13 = arith.constant 1.000000e+00 : bf16
    %82 = vector.broadcast %cst_13 : bf16 to vector<8x384xbf16>
    %83 = arith.addf %82, %81 : vector<8x384xbf16>
    %84 = arith.divf %82, %83 : vector<8x384xbf16>
    %85 = vector.extract_strided_slice %78 {offsets = [0, 384], sizes = [8, 128], strides = [1, 1]} : vector<8x512xbf16> to vector<8x128xbf16>
    %86 = math.tanh %85 : vector<8x128xbf16>
    %87 = vector.extract_strided_slice %84 {offsets = [0, 0], sizes = [8, 128], strides = [1, 1]} : vector<8x384xbf16> to vector<8x128xbf16>
    %88 = vector.extract_strided_slice %84 {offsets = [0, 128], sizes = [8, 128], strides = [1, 1]} : vector<8x384xbf16> to vector<8x128xbf16>
    %89 = vector.extract_strided_slice %84 {offsets = [0, 256], sizes = [8, 128], strides = [1, 1]} : vector<8x384xbf16> to vector<8x128xbf16>
    %90 = arith.extf %88 : vector<8x128xbf16> to vector<8x128xf32>
    %91 = arith.mulf %90, %66 : vector<8x128xf32>
    %92 = arith.extf %87 : vector<8x128xbf16> to vector<8x128xf32>
    %93 = arith.extf %86 : vector<8x128xbf16> to vector<8x128xf32>
    %94 = arith.mulf %92, %93 : vector<8x128xf32>
    %95 = arith.addf %91, %94 : vector<8x128xf32>
    %96 = math.tanh %95 : vector<8x128xf32>
    %97 = arith.truncf %96 : vector<8x128xf32> to vector<8x128xbf16>
    %98 = arith.mulf %89, %97 : vector<8x128xbf16>
    %99 = vector.extract_strided_slice %2 {offsets = [0, 3], sizes = [8, 1], strides = [1, 1]} : vector<8x8xbf16> to vector<8x1xbf16>
    %c0_i32_14 = arith.constant 0 : i32
    %100 = vector.broadcast %c0_i32_14 : i32 to vector<8x128xi32>
    %101 = arith.cmpi eq, %3, %100 : vector<8x128xi32>
    %102 = vector.shape_cast %99 : vector<8x1xbf16> to vector<8x1xbf16>
    %103 = vector.broadcast %102 : vector<8x1xbf16> to vector<8x128xbf16>
    %104 = arith.select %101, %103, %9 : vector<8x128xi1>, vector<8x128xbf16>
    %105 = tpu.concatenate %98, %104 in 1 : vector<8x128xbf16>, vector<8x128xbf16> -> vector<8x256xbf16>
    %cst_15 = arith.constant dense<0.000000e+00> : vector<8x512xf32>
    %106 = tpu.matmul %105, %0, %cst_15 {dimension_numbers = #tpu.dot_dimension_numbers<[1], [0], [0], [1], [0, 0, 1, 1], [], []>} : vector<8x256xbf16>, vector<256x512xbf16>, vector<8x512xf32> -> vector<8x512xf32>
    %107 = arith.truncf %106 : vector<8x512xf32> to vector<8x512xbf16>
    %108 = vector.extract_strided_slice %107 {offsets = [0, 0], sizes = [8, 384], strides = [1, 1]} : vector<8x512xbf16> to vector<8x384xbf16>
    %109 = arith.negf %108 : vector<8x384xbf16>
    %110 = math.exp %109 : vector<8x384xbf16>
    %cst_16 = arith.constant 1.000000e+00 : bf16
    %111 = vector.broadcast %cst_16 : bf16 to vector<8x384xbf16>
    %112 = arith.addf %111, %110 : vector<8x384xbf16>
    %113 = arith.divf %111, %112 : vector<8x384xbf16>
    %114 = vector.extract_strided_slice %107 {offsets = [0, 384], sizes = [8, 128], strides = [1, 1]} : vector<8x512xbf16> to vector<8x128xbf16>
    %115 = math.tanh %114 : vector<8x128xbf16>
    %116 = vector.extract_strided_slice %113 {offsets = [0, 0], sizes = [8, 128], strides = [1, 1]} : vector<8x384xbf16> to vector<8x128xbf16>
    %117 = vector.extract_strided_slice %113 {offsets = [0, 128], sizes = [8, 128], strides = [1, 1]} : vector<8x384xbf16> to vector<8x128xbf16>
    %118 = vector.extract_strided_slice %113 {offsets = [0, 256], sizes = [8, 128], strides = [1, 1]} : vector<8x384xbf16> to vector<8x128xbf16>
    %119 = arith.extf %117 : vector<8x128xbf16> to vector<8x128xf32>
    %120 = arith.mulf %119, %95 : vector<8x128xf32>
    %121 = arith.extf %116 : vector<8x128xbf16> to vector<8x128xf32>
    %122 = arith.extf %115 : vector<8x128xbf16> to vector<8x128xf32>
    %123 = arith.mulf %121, %122 : vector<8x128xf32>
    %124 = arith.addf %120, %123 : vector<8x128xf32>
    %125 = math.tanh %124 : vector<8x128xf32>
    %126 = arith.truncf %125 : vector<8x128xf32> to vector<8x128xbf16>
    %127 = arith.mulf %118, %126 : vector<8x128xbf16>
    %128 = vector.extract_strided_slice %2 {offsets = [0, 4], sizes = [8, 1], strides = [1, 1]} : vector<8x8xbf16> to vector<8x1xbf16>
    %c0_i32_17 = arith.constant 0 : i32
    %129 = vector.broadcast %c0_i32_17 : i32 to vector<8x128xi32>
    %130 = arith.cmpi eq, %3, %129 : vector<8x128xi32>
    %131 = vector.shape_cast %128 : vector<8x1xbf16> to vector<8x1xbf16>
    %132 = vector.broadcast %131 : vector<8x1xbf16> to vector<8x128xbf16>
    %133 = arith.select %130, %132, %9 : vector<8x128xi1>, vector<8x128xbf16>
    %134 = tpu.concatenate %127, %133 in 1 : vector<8x128xbf16>, vector<8x128xbf16> -> vector<8x256xbf16>
    %cst_18 = arith.constant dense<0.000000e+00> : vector<8x512xf32>
    %135 = tpu.matmul %134, %0, %cst_18 {dimension_numbers = #tpu.dot_dimension_numbers<[1], [0], [0], [1], [0, 0, 1, 1], [], []>} : vector<8x256xbf16>, vector<256x512xbf16>, vector<8x512xf32> -> vector<8x512xf32>
    %136 = arith.truncf %135 : vector<8x512xf32> to vector<8x512xbf16>
    %137 = vector.extract_strided_slice %136 {offsets = [0, 0], sizes = [8, 384], strides = [1, 1]} : vector<8x512xbf16> to vector<8x384xbf16>
    %138 = arith.negf %137 : vector<8x384xbf16>
    %139 = math.exp %138 : vector<8x384xbf16>
    %cst_19 = arith.constant 1.000000e+00 : bf16
    %140 = vector.broadcast %cst_19 : bf16 to vector<8x384xbf16>
    %141 = arith.addf %140, %139 : vector<8x384xbf16>
    %142 = arith.divf %140, %141 : vector<8x384xbf16>
    %143 = vector.extract_strided_slice %136 {offsets = [0, 384], sizes = [8, 128], strides = [1, 1]} : vector<8x512xbf16> to vector<8x128xbf16>
    %144 = math.tanh %143 : vector<8x128xbf16>
    %145 = vector.extract_strided_slice %142 {offsets = [0, 0], sizes = [8, 128], strides = [1, 1]} : vector<8x384xbf16> to vector<8x128xbf16>
    %146 = vector.extract_strided_slice %142 {offsets = [0, 128], sizes = [8, 128], strides = [1, 1]} : vector<8x384xbf16> to vector<8x128xbf16>
    %147 = vector.extract_strided_slice %142 {offsets = [0, 256], sizes = [8, 128], strides = [1, 1]} : vector<8x384xbf16> to vector<8x128xbf16>
    %148 = arith.extf %146 : vector<8x128xbf16> to vector<8x128xf32>
    %149 = arith.mulf %148, %124 : vector<8x128xf32>
    %150 = arith.extf %145 : vector<8x128xbf16> to vector<8x128xf32>
    %151 = arith.extf %144 : vector<8x128xbf16> to vector<8x128xf32>
    %152 = arith.mulf %150, %151 : vector<8x128xf32>
    %153 = arith.addf %149, %152 : vector<8x128xf32>
    %154 = math.tanh %153 : vector<8x128xf32>
    %155 = arith.truncf %154 : vector<8x128xf32> to vector<8x128xbf16>
    %156 = arith.mulf %147, %155 : vector<8x128xbf16>
    %157 = vector.extract_strided_slice %2 {offsets = [0, 5], sizes = [8, 1], strides = [1, 1]} : vector<8x8xbf16> to vector<8x1xbf16>
    %c0_i32_20 = arith.constant 0 : i32
    %158 = vector.broadcast %c0_i32_20 : i32 to vector<8x128xi32>
    %159 = arith.cmpi eq, %3, %158 : vector<8x128xi32>
    %160 = vector.shape_cast %157 : vector<8x1xbf16> to vector<8x1xbf16>
    %161 = vector.broadcast %160 : vector<8x1xbf16> to vector<8x128xbf16>
    %162 = arith.select %159, %161, %9 : vector<8x128xi1>, vector<8x128xbf16>
    %163 = tpu.concatenate %156, %162 in 1 : vector<8x128xbf16>, vector<8x128xbf16> -> vector<8x256xbf16>
    %cst_21 = arith.constant dense<0.000000e+00> : vector<8x512xf32>
    %164 = tpu.matmul %163, %0, %cst_21 {dimension_numbers = #tpu.dot_dimension_numbers<[1], [0], [0], [1], [0, 0, 1, 1], [], []>} : vector<8x256xbf16>, vector<256x512xbf16>, vector<8x512xf32> -> vector<8x512xf32>
    %165 = arith.truncf %164 : vector<8x512xf32> to vector<8x512xbf16>
    %166 = vector.extract_strided_slice %165 {offsets = [0, 0], sizes = [8, 384], strides = [1, 1]} : vector<8x512xbf16> to vector<8x384xbf16>
    %167 = arith.negf %166 : vector<8x384xbf16>
    %168 = math.exp %167 : vector<8x384xbf16>
    %cst_22 = arith.constant 1.000000e+00 : bf16
    %169 = vector.broadcast %cst_22 : bf16 to vector<8x384xbf16>
    %170 = arith.addf %169, %168 : vector<8x384xbf16>
    %171 = arith.divf %169, %170 : vector<8x384xbf16>
    %172 = vector.extract_strided_slice %165 {offsets = [0, 384], sizes = [8, 128], strides = [1, 1]} : vector<8x512xbf16> to vector<8x128xbf16>
    %173 = math.tanh %172 : vector<8x128xbf16>
    %174 = vector.extract_strided_slice %171 {offsets = [0, 0], sizes = [8, 128], strides = [1, 1]} : vector<8x384xbf16> to vector<8x128xbf16>
    %175 = vector.extract_strided_slice %171 {offsets = [0, 128], sizes = [8, 128], strides = [1, 1]} : vector<8x384xbf16> to vector<8x128xbf16>
    %176 = vector.extract_strided_slice %171 {offsets = [0, 256], sizes = [8, 128], strides = [1, 1]} : vector<8x384xbf16> to vector<8x128xbf16>
    %177 = arith.extf %175 : vector<8x128xbf16> to vector<8x128xf32>
    %178 = arith.mulf %177, %153 : vector<8x128xf32>
    %179 = arith.extf %174 : vector<8x128xbf16> to vector<8x128xf32>
    %180 = arith.extf %173 : vector<8x128xbf16> to vector<8x128xf32>
    %181 = arith.mulf %179, %180 : vector<8x128xf32>
    %182 = arith.addf %178, %181 : vector<8x128xf32>
    %183 = math.tanh %182 : vector<8x128xf32>
    %184 = arith.truncf %183 : vector<8x128xf32> to vector<8x128xbf16>
    %185 = arith.mulf %176, %184 : vector<8x128xbf16>
    %186 = vector.extract_strided_slice %2 {offsets = [0, 6], sizes = [8, 1], strides = [1, 1]} : vector<8x8xbf16> to vector<8x1xbf16>
    %c0_i32_23 = arith.constant 0 : i32
    %187 = vector.broadcast %c0_i32_23 : i32 to vector<8x128xi32>
    %188 = arith.cmpi eq, %3, %187 : vector<8x128xi32>
    %189 = vector.shape_cast %186 : vector<8x1xbf16> to vector<8x1xbf16>
    %190 = vector.broadcast %189 : vector<8x1xbf16> to vector<8x128xbf16>
    %191 = arith.select %188, %190, %9 : vector<8x128xi1>, vector<8x128xbf16>
    %192 = tpu.concatenate %185, %191 in 1 : vector<8x128xbf16>, vector<8x128xbf16> -> vector<8x256xbf16>
    %cst_24 = arith.constant dense<0.000000e+00> : vector<8x512xf32>
    %193 = tpu.matmul %192, %0, %cst_24 {dimension_numbers = #tpu.dot_dimension_numbers<[1], [0], [0], [1], [0, 0, 1, 1], [], []>} : vector<8x256xbf16>, vector<256x512xbf16>, vector<8x512xf32> -> vector<8x512xf32>
    %194 = arith.truncf %193 : vector<8x512xf32> to vector<8x512xbf16>
    %195 = vector.extract_strided_slice %194 {offsets = [0, 0], sizes = [8, 384], strides = [1, 1]} : vector<8x512xbf16> to vector<8x384xbf16>
    %196 = arith.negf %195 : vector<8x384xbf16>
    %197 = math.exp %196 : vector<8x384xbf16>
    %cst_25 = arith.constant 1.000000e+00 : bf16
    %198 = vector.broadcast %cst_25 : bf16 to vector<8x384xbf16>
    %199 = arith.addf %198, %197 : vector<8x384xbf16>
    %200 = arith.divf %198, %199 : vector<8x384xbf16>
    %201 = vector.extract_strided_slice %194 {offsets = [0, 384], sizes = [8, 128], strides = [1, 1]} : vector<8x512xbf16> to vector<8x128xbf16>
    %202 = math.tanh %201 : vector<8x128xbf16>
    %203 = vector.extract_strided_slice %200 {offsets = [0, 0], sizes = [8, 128], strides = [1, 1]} : vector<8x384xbf16> to vector<8x128xbf16>
    %204 = vector.extract_strided_slice %200 {offsets = [0, 128], sizes = [8, 128], strides = [1, 1]} : vector<8x384xbf16> to vector<8x128xbf16>
    %205 = vector.extract_strided_slice %200 {offsets = [0, 256], sizes = [8, 128], strides = [1, 1]} : vector<8x384xbf16> to vector<8x128xbf16>
    %206 = arith.extf %204 : vector<8x128xbf16> to vector<8x128xf32>
    %207 = arith.mulf %206, %182 : vector<8x128xf32>
    %208 = arith.extf %203 : vector<8x128xbf16> to vector<8x128xf32>
    %209 = arith.extf %202 : vector<8x128xbf16> to vector<8x128xf32>
    %210 = arith.mulf %208, %209 : vector<8x128xf32>
    %211 = arith.addf %207, %210 : vector<8x128xf32>
    %212 = math.tanh %211 : vector<8x128xf32>
    %213 = arith.truncf %212 : vector<8x128xf32> to vector<8x128xbf16>
    %214 = arith.mulf %205, %213 : vector<8x128xbf16>
    %215 = vector.extract_strided_slice %2 {offsets = [0, 7], sizes = [8, 1], strides = [1, 1]} : vector<8x8xbf16> to vector<8x1xbf16>
    %c0_i32_26 = arith.constant 0 : i32
    %216 = vector.broadcast %c0_i32_26 : i32 to vector<8x128xi32>
    %217 = arith.cmpi eq, %3, %216 : vector<8x128xi32>
    %218 = vector.shape_cast %215 : vector<8x1xbf16> to vector<8x1xbf16>
    %219 = vector.broadcast %218 : vector<8x1xbf16> to vector<8x128xbf16>
    %220 = arith.select %217, %219, %9 : vector<8x128xi1>, vector<8x128xbf16>
    %221 = tpu.concatenate %214, %220 in 1 : vector<8x128xbf16>, vector<8x128xbf16> -> vector<8x256xbf16>
    %cst_27 = arith.constant dense<0.000000e+00> : vector<8x512xf32>
    %222 = tpu.matmul %221, %0, %cst_27 {dimension_numbers = #tpu.dot_dimension_numbers<[1], [0], [0], [1], [0, 0, 1, 1], [], []>} : vector<8x256xbf16>, vector<256x512xbf16>, vector<8x512xf32> -> vector<8x512xf32>
    %223 = arith.truncf %222 : vector<8x512xf32> to vector<8x512xbf16>
    %224 = vector.extract_strided_slice %223 {offsets = [0, 0], sizes = [8, 384], strides = [1, 1]} : vector<8x512xbf16> to vector<8x384xbf16>
    %225 = arith.negf %224 : vector<8x384xbf16>
    %226 = math.exp %225 : vector<8x384xbf16>
    %cst_28 = arith.constant 1.000000e+00 : bf16
    %227 = vector.broadcast %cst_28 : bf16 to vector<8x384xbf16>
    %228 = arith.addf %227, %226 : vector<8x384xbf16>
    %229 = arith.divf %227, %228 : vector<8x384xbf16>
    %230 = vector.extract_strided_slice %223 {offsets = [0, 384], sizes = [8, 128], strides = [1, 1]} : vector<8x512xbf16> to vector<8x128xbf16>
    %231 = math.tanh %230 : vector<8x128xbf16>
    %232 = vector.extract_strided_slice %229 {offsets = [0, 0], sizes = [8, 128], strides = [1, 1]} : vector<8x384xbf16> to vector<8x128xbf16>
    %233 = vector.extract_strided_slice %229 {offsets = [0, 128], sizes = [8, 128], strides = [1, 1]} : vector<8x384xbf16> to vector<8x128xbf16>
    %234 = vector.extract_strided_slice %229 {offsets = [0, 256], sizes = [8, 128], strides = [1, 1]} : vector<8x384xbf16> to vector<8x128xbf16>
    %235 = arith.extf %233 : vector<8x128xbf16> to vector<8x128xf32>
    %236 = arith.mulf %235, %211 : vector<8x128xf32>
    %237 = arith.extf %232 : vector<8x128xbf16> to vector<8x128xf32>
    %238 = arith.extf %231 : vector<8x128xbf16> to vector<8x128xf32>
    %239 = arith.mulf %237, %238 : vector<8x128xf32>
    %240 = arith.addf %236, %239 : vector<8x128xf32>
    %241 = math.tanh %240 : vector<8x128xf32>
    %242 = arith.extf %234 : vector<8x128xbf16> to vector<8x128xf32>
    %243 = arith.mulf %242, %241 : vector<8x128xf32>
    %c0_29 = arith.constant 0 : index
    %c0_30 = arith.constant 0 : index
    %244 = vector.load %arg3[%c0_29, %c0_30] : memref<1x128xf32, #tpu.memory_space<vmem>>, vector<1x128xf32>
    %245 = vector.broadcast %244 : vector<1x128xf32> to vector<8x128xf32>
    %246 = arith.mulf %243, %245 : vector<8x128xf32>
    %cst_31 = arith.constant dense<0.000000e+00> : vector<8xf32>
    %247 = vector.multi_reduction <add>, %246, %cst_31 [1] : vector<8x128xf32> to vector<8xf32>
    %248 = vector.shape_cast %247 : vector<8xf32> to vector<8x1xf32>
    %c0_32 = arith.constant 0 : index
    %c0_33 = arith.constant 0 : index
    %249 = vector.load %arg4[%c0_32, %c0_33] : memref<1x1xf32, #tpu.memory_space<vmem>>, vector<1x1xf32>
    %250 = vector.broadcast %249 : vector<1x1xf32> to vector<8x1xf32>
    %251 = arith.addf %248, %250 : vector<8x1xf32>
    %c0_34 = arith.constant 0 : index
    %c0_35 = arith.constant 0 : index
    %252 = vector.load %arg5[%c0_34, %c0_35] : memref<8x1xf32, #tpu.memory_space<vmem>>, vector<8x1xf32>
    tpu.vector_store %arg5[%c0_34, %c0_35], %251 {strides = array<i32>} : memref<8x1xf32, #tpu.memory_space<vmem>>, vector<8x1xf32>,
    return
  }
  func.func @transform_0(%arg0: i32) -> (i32, i32) {
    %c0_i32 = arith.constant 0 : i32
    %c0_i32_0 = arith.constant 0 : i32
    return %arg0, %c0_i32 : i32, i32
  }
  func.func @transform_1(%arg0: i32) -> (i32, i32) {
    %c0_i32 = arith.constant 0 : i32
    %c0_i32_0 = arith.constant 0 : i32
    %c0_i32_1 = arith.constant 0 : i32
    return %c0_i32, %c0_i32_0 : i32, i32
  }
  func.func @transform_2(%arg0: i32) -> (i32, i32) {
    %c0_i32 = arith.constant 0 : i32
    %c0_i32_0 = arith.constant 0 : i32
    %c0_i32_1 = arith.constant 0 : i32
    return %c0_i32, %c0_i32_0 : i32, i32
  }
  func.func @transform_3(%arg0: i32) -> (i32, i32) {
    %c0_i32 = arith.constant 0 : i32
    %c0_i32_0 = arith.constant 0 : i32
    %c0_i32_1 = arith.constant 0 : i32
    return %c0_i32, %c0_i32_0 : i32, i32
  }
  func.func @transform_4(%arg0: i32) -> (i32, i32) {
    %c0_i32 = arith.constant 0 : i32
    %c0_i32_0 = arith.constant 0 : i32
    return %arg0, %c0_i32 : i32, i32
  }
}

</mosaic_0001>

<llo_original>
// kernel: tpu_custom_call.1
$region0: #{tpu_custom_call.1}
  #allocation0 [shape = 'u32[]', space=smem, size = 0x4, offset = 0x4, fixed_abs, tag = 'smem constant byte address 0x4 - core index']
  #allocation1 [shape = 'u32[72,128]{1,0:T(1,128)}', space=vmem, size = 0x9000, scoped, tag = 'internal scratch']
  #allocation2 [shape = 'f32[1,1]{1,0:T(1,128)S(1)}', space=vmem, size = 0x200, scoped, tag = 'scoped memory for tpu_custom_call.1']
  %s0 = inlined_call_operand.hbm [shape: f32[8,8], index: 0, kind: input, shape index: {}]
  %s1 = inlined_call_operand.hbm [shape: bf16[256,512], index: 1, kind: input, shape index: {}]
  %s2 = inlined_call_operand.vmem [shape: f32[1,128], index: 2, kind: input, shape index: {}]
  %s3 = inlined_call_operand.<no memory space> [shape: f32[1,1], index: 3, kind: input, shape index: {}]
  %s4 = inlined_call_operand.vmem [shape: f32[8,1], index: 4, kind: output, shape index: {}]
  %s5 = sld [smem:[#allocation0]]
  $region34: #{tpu_custom_call.1} parent=0
    _
  %s7 = ssub.s32 1, %s5
  %s8 = scalar_select 0, %s7, %s5
  %v9 = vstv %s3
  %10 = vst [vmem:[#allocation2] sm:$0x1] %v9
  $region1: #{tpu_custom_call.1} parent=0
    #allocation3 [shape = 'u8[4096]{0}', space=vmem, size = 0x1000, scoped, tag = 'input window, operand 0, single buffered']
    #allocation4 [shape = 's32[1]{0}', space=sflag, size = 0x4, scoped, tag = 'scoped memory for tpu_custom_call.1']
    #allocation5 [shape = 'u8[262144]{0}', space=vmem, size = 0x40000, scoped, tag = 'input window, operand 1, single buffered']
    #allocation6 [shape = 's32[1]{0}', space=sflag, size = 0x4, scoped, tag = 'scoped memory for tpu_custom_call.1']
    %11 = vsyncpa [#allocation4], 0
    %12 = vsyncpa [#allocation6], 0
    // Predicated region
    $region2: #{tpu_custom_call.1} parent=1 // pred_check
      _
    $region3: #{tpu_custom_call.1} parent=1 // pred_check_branch
      %14 = sbr.rel (0) target = $region5
    $region4: #{tpu_custom_call.1} parent=1 // pred_region
      %16 = vsyncadd [#allocation4], 0
      %s18 = sshll.u32 %s0, 4
      %s19 = int_to_ptr.hbm [resolvable:$true] %s18
      %s20 = sshll.u32 [#allocation3], 4
      %s21 = int_to_ptr.vmem [resolvable:$true] %s20
      %23 = dma.hbm_to_vmem [thread:$0]  %s19, 128, %s21, [#allocation4]
    $region5: #{tpu_custom_call.1} parent=1 // pred_fallthru
      _
    // Predicated region
    $region6: #{tpu_custom_call.1} parent=1 // pred_check
      _
    $region7: #{tpu_custom_call.1} parent=1 // pred_check_branch
      %25 = sbr.rel (0) target = $region9
    $region8: #{tpu_custom_call.1} parent=1 // pred_region
      %27 = vsyncadd [#allocation6], 0
      %s28 = sshll.u32 %s1, 4
      %s29 = int_to_ptr.hbm [resolvable:$true] %s28
      %s30 = sshll.u32 [#allocation5], 4
      %s31 = int_to_ptr.vmem [resolvable:$true] %s30
      %36 = dma.hbm_to_vmem [thread:$0]  %s29, 8192, %s31, [#allocation6], 256, 256, 16
    $region9: #{tpu_custom_call.1} parent=1 // pred_fallthru
      _
    // Predicated region
    $region10: #{tpu_custom_call.1} parent=1 // pred_check
      _
    $region11: #{tpu_custom_call.1} parent=1 // pred_check_branch
      %38 = sbr.rel (0) target = $region13
    $region12: #{tpu_custom_call.1} parent=1 // pred_region
      _
    $region13: #{tpu_custom_call.1} parent=1 // pred_fallthru
      _
    // Predicated region
    $region14: #{tpu_custom_call.1} parent=1 // pred_check
      _
    $region15: #{tpu_custom_call.1} parent=1 // pred_check_branch
      %40 = sbr.rel (0) target = $region17
    $region16: #{tpu_custom_call.1} parent=1 // pred_region
      _
    $region17: #{tpu_custom_call.1} parent=1 // pred_fallthru
      _
    // Predicated region
    $region18: #{tpu_custom_call.1} parent=1 // pred_check
      _
    $region19: #{tpu_custom_call.1} parent=1 // pred_check_branch
      %42 = sbr.rel (0) target = $region21
    $region20: #{tpu_custom_call.1} parent=1 // pred_region
      %44 = dma.done [#allocation4], 128
    $region21: #{tpu_custom_call.1} parent=1 // pred_fallthru
      _
    // Predicated region
    $region22: #{tpu_custom_call.1} parent=1 // pred_check
      _
    $region23: #{tpu_custom_call.1} parent=1 // pred_check_branch
      %46 = sbr.rel (0) target = $region25
    $region24: #{tpu_custom_call.1} parent=1 // pred_region
      %48 = dma.done [#allocation6], 8192
    $region25: #{tpu_custom_call.1} parent=1 // pred_fallthru
      _
    %v51 = vld [vmem:[#allocation5] sm:$0xff]
    %v52 = vld [vmem:[#allocation5 + $0x8] sm:$0xff]
    %v53 = vld [vmem:[#allocation5 + $0x10] sm:$0xff]
    %v54 = vld [vmem:[#allocation5 + $0x18] sm:$0xff]
    %v55 = vld [vmem:[#allocation5 + $0x20] sm:$0xff]
    %v56 = vld [vmem:[#allocation5 + $0x28] sm:$0xff]
    %v57 = vld [vmem:[#allocation5 + $0x30] sm:$0xff]
    %v58 = vld [vmem:[#allocation5 + $0x38] sm:$0xff]
    %v59 = vld [vmem:[#allocation5 + $0x40] sm:$0xff]
    %v60 = vld [vmem:[#allocation5 + $0x48] sm:$0xff]
    %v61 = vld [vmem:[#allocation5 + $0x50] sm:$0xff]
    %v62 = vld [vmem:[#allocation5 + $0x58] sm:$0xff]
    %v63 = vld [vmem:[#allocation5 + $0x60] sm:$0xff]
    %v64 = vld [vmem:[#allocation5 + $0x68] sm:$0xff]
    %v65 = vld [vmem:[#allocation5 + $0x70] sm:$0xff]
    %v66 = vld [vmem:[#allocation5 + $0x78] sm:$0xff]
    %v67 = vld [vmem:[#allocation5 + $0x80] sm:$0xff]
    %v68 = vld [vmem:[#allocation5 + $0x88] sm:$0xff]
    %v69 = vld [vmem:[#allocation5 + $0x90] sm:$0xff]
    %v70 = vld [vmem:[#allocation5 + $0x98] sm:$0xff]
    %v71 = vld [vmem:[#allocation5 + $0xa0] sm:$0xff]
    %v72 = vld [vmem:[#allocation5 + $0xa8] sm:$0xff]
    %v73 = vld [vmem:[#allocation5 + $0xb0] sm:$0xff]
    %v74 = vld [vmem:[#allocation5 + $0xb8] sm:$0xff]
    %v75 = vld [vmem:[#allocation5 + $0xc0] sm:$0xff]
    %v76 = vld [vmem:[#allocation5 + $0xc8] sm:$0xff]
    %v77 = vld [vmem:[#allocation5 + $0xd0] sm:$0xff]
    %v78 = vld [vmem:[#allocation5 + $0xd8] sm:$0xff]
    %v79 = vld [vmem:[#allocation5 + $0xe0] sm:$0xff]
    %v80 = vld [vmem:[#allocation5 + $0xe8] sm:$0xff]
    %v81 = vld [vmem:[#allocation5 + $0xf0] sm:$0xff]
    %v82 = vld [vmem:[#allocation5 + $0xf8] sm:$0xff]
    %v83 = vld [vmem:[#allocation5 + $0x100] sm:$0xff]
    %v84 = vld [vmem:[#allocation5 + $0x108] sm:$0xff]
    %v85 = vld [vmem:[#allocation5 + $0x110] sm:$0xff]
    %v86 = vld [vmem:[#allocation5 + $0x118] sm:$0xff]
    %v87 = vld [vmem:[#allocation5 + $0x120] sm:$0xff]
    %v88 = vld [vmem:[#allocation5 + $0x128] sm:$0xff]
    %v89 = vld [vmem:[#allocation5 + $0x130] sm:$0xff]
    %v90 = vld [vmem:[#allocation5 + $0x138] sm:$0xff]
    %v91 = vld [vmem:[#allocation5 + $0x140] sm:$0xff]
    %v92 = vld [vmem:[#allocation5 + $0x148] sm:$0xff]
    %v93 = vld [vmem:[#allocation5 + $0x150] sm:$0xff]
    %v94 = vld [vmem:[#allocation5 + $0x158] sm:$0xff]
    %v95 = vld [vmem:[#allocation5 + $0x160] sm:$0xff]
    %v96 = vld [vmem:[#allocation5 + $0x168] sm:$0xff]
    %v97 = vld [vmem:[#allocation5 + $0x170] sm:$0xff]
    %v98 = vld [vmem:[#allocation5 + $0x178] sm:$0xff]
    %v99 = vld [vmem:[#allocation5 + $0x180] sm:$0xff]
    %v100 = vld [vmem:[#allocation5 + $0x188] sm:$0xff]
    %v101 = vld [vmem:[#allocation5 + $0x190] sm:$0xff]
    %v102 = vld [vmem:[#allocation5 + $0x198] sm:$0xff]
    %v103 = vld [vmem:[#allocation5 + $0x1a0] sm:$0xff]
    %v104 = vld [vmem:[#allocation5 + $0x1a8] sm:$0xff]
    %v105 = vld [vmem:[#allocation5 + $0x1b0] sm:$0xff]
    %v106 = vld [vmem:[#allocation5 + $0x1b8] sm:$0xff]
    %v107 = vld [vmem:[#allocation5 + $0x1c0] sm:$0xff]
    %v108 = vld [vmem:[#allocation5 + $0x1c8] sm:$0xff]
    %v109 = vld [vmem:[#allocation5 + $0x1d0] sm:$0xff]
    %v110 = vld [vmem:[#allocation5 + $0x1d8] sm:$0xff]
    %v111 = vld [vmem:[#allocation5 + $0x1e0] sm:$0xff]
    %v112 = vld [vmem:[#allocation5 + $0x1e8] sm:$0xff]
    %v113 = vld [vmem:[#allocation5 + $0x1f0] sm:$0xff]
    %v114 = vld [vmem:[#allocation5 + $0x1f8] sm:$0xff]
    %v115 = vld [vmem:[#allocation3] sm:$0xff]
    %v116 = vpack.c.bf16 %v115, %v115
    %v117 = vlaneseq
    %v118 = vand.u32 %v117, 127
    %vm119 = vcmp.eq.s32.totalorder %v118, 1
    %v120 = vsel %vm119, 1.0, 0.0
    %v121 = vpack.c.bf16 %v120, %v120
    %vm122 = vcmp.eq.s32.totalorder %v118, 0
    %124 = vset.pattern.permute.xlu0 0
    %125 = vperm.xlu0 %124, %v116
    %v126 = vpop.permute.xlu0 %125
    %v129 = vunpack.c.l.s4 839922192
    %v130 = vunpack.c.0.s8 %v129
    %v131 = vperm.slane %v126, %v130
    %vm132 = vmpackc.low %vm122, %vm122
    %v133 = vsel %vm132, %v131, %v121
    %v198 = vunpack.c.l.b16 %v51
    %v199 = vunpack.c.h.b16 %v51
    %v200 = vunpack.c.l.b16 %v52
    %v201 = vunpack.c.h.b16 %v52
    %v202 = vunpack.c.l.b16 %v53
    %v203 = vunpack.c.h.b16 %v53
    %v204 = vunpack.c.l.b16 %v54
    %v205 = vunpack.c.h.b16 %v54
    %v206 = vunpack.c.l.b16 %v55
    %v207 = vunpack.c.h.b16 %v55
    %v208 = vunpack.c.l.b16 %v56
    %v209 = vunpack.c.h.b16 %v56
    %v210 = vunpack.c.l.b16 %v57
    %v211 = vunpack.c.h.b16 %v57
    %v212 = vunpack.c.l.b16 %v58
    %v213 = vunpack.c.h.b16 %v58
    %v214 = vunpack.c.l.b16 %v59
    %v215 = vunpack.c.h.b16 %v59
    %v216 = vunpack.c.l.b16 %v60
    %v217 = vunpack.c.h.b16 %v60
    %v218 = vunpack.c.l.b16 %v61
    %v219 = vunpack.c.h.b16 %v61
    %v220 = vunpack.c.l.b16 %v62
    %v221 = vunpack.c.h.b16 %v62
    %v222 = vunpack.c.l.b16 %v63
    %v223 = vunpack.c.h.b16 %v63
    %v224 = vunpack.c.l.b16 %v64
    %v225 = vunpack.c.h.b16 %v64
    %v226 = vunpack.c.l.b16 %v65
    %v227 = vunpack.c.h.b16 %v65
    %v228 = vunpack.c.l.b16 %v66
    %v229 = vunpack.c.h.b16 %v66
    %v230 = vunpack.c.l.b16 %v67
    %v231 = vunpack.c.h.b16 %v67
    %v232 = vunpack.c.l.b16 %v68
    %v233 = vunpack.c.h.b16 %v68
    %v234 = vunpack.c.l.b16 %v69
    %v235 = vunpack.c.h.b16 %v69
    %v236 = vunpack.c.l.b16 %v70
    %v237 = vunpack.c.h.b16 %v70
    %v238 = vunpack.c.l.b16 %v71
    %v239 = vunpack.c.h.b16 %v71
    %v240 = vunpack.c.l.b16 %v72
    %v241 = vunpack.c.h.b16 %v72
    %v242 = vunpack.c.l.b16 %v73
    %v243 = vunpack.c.h.b16 %v73
    %v244 = vunpack.c.l.b16 %v74
    %v245 = vunpack.c.h.b16 %v74
    %v246 = vunpack.c.l.b16 %v75
    %v247 = vunpack.c.h.b16 %v75
    %v248 = vunpack.c.l.b16 %v76
    %v249 = vunpack.c.h.b16 %v76
    %v250 = vunpack.c.l.b16 %v77
    %v251 = vunpack.c.h.b16 %v77
    %v252 = vunpack.c.l.b16 %v78
    %v253 = vunpack.c.h.b16 %v78
    %v254 = vunpack.c.l.b16 %v79
    %v255 = vunpack.c.h.b16 %v79
    %v256 = vunpack.c.l.b16 %v80
    %v257 = vunpack.c.h.b16 %v80
    %v258 = vunpack.c.l.b16 %v81
    %v259 = vunpack.c.h.b16 %v81
    %v260 = vunpack.c.l.b16 %v82
    %v261 = vunpack.c.h.b16 %v82
    %v262 = vunpack.c.l.b16 %v83
    %v263 = vunpack.c.h.b16 %v83
    %v264 = vunpack.c.l.b16 %v84
    %v265 = vunpack.c.h.b16 %v84
    %v266 = vunpack.c.l.b16 %v85
    %v267 = vunpack.c.h.b16 %v85
    %v268 = vunpack.c.l.b16 %v86
    %v269 = vunpack.c.h.b16 %v86
    %v270 = vunpack.c.l.b16 %v87
    %v271 = vunpack.c.h.b16 %v87
    %v272 = vunpack.c.l.b16 %v88
    %v273 = vunpack.c.h.b16 %v88
    %v274 = vunpack.c.l.b16 %v89
    %v275 = vunpack.c.h.b16 %v89
    %v276 = vunpack.c.l.b16 %v90
    %v277 = vunpack.c.h.b16 %v90
    %v278 = vunpack.c.l.b16 %v91
    %v279 = vunpack.c.h.b16 %v91
    %v280 = vunpack.c.l.b16 %v92
    %v281 = vunpack.c.h.b16 %v92
    %v282 = vunpack.c.l.b16 %v93
    %v283 = vunpack.c.h.b16 %v93
    %v284 = vunpack.c.l.b16 %v94
    %v285 = vunpack.c.h.b16 %v94
    %v286 = vunpack.c.l.b16 %v95
    %v287 = vunpack.c.h.b16 %v95
    %v288 = vunpack.c.l.b16 %v96
    %v289 = vunpack.c.h.b16 %v96
    %v290 = vunpack.c.l.b16 %v97
    %v291 = vunpack.c.h.b16 %v97
    %v292 = vunpack.c.l.b16 %v98
    %v293 = vunpack.c.h.b16 %v98
    %v294 = vunpack.c.l.b16 %v99
    %v295 = vunpack.c.h.b16 %v99
    %v296 = vunpack.c.l.b16 %v100
    %v297 = vunpack.c.h.b16 %v100
    %v298 = vunpack.c.l.b16 %v101
    %v299 = vunpack.c.h.b16 %v101
    %v300 = vunpack.c.l.b16 %v102
    %v301 = vunpack.c.h.b16 %v102
    %v302 = vunpack.c.l.b16 %v103
    %v303 = vunpack.c.h.b16 %v103
    %v304 = vunpack.c.l.b16 %v104
    %v305 = vunpack.c.h.b16 %v104
    %v306 = vunpack.c.l.b16 %v105
    %v307 = vunpack.c.h.b16 %v105
    %v308 = vunpack.c.l.b16 %v106
    %v309 = vunpack.c.h.b16 %v106
    %v310 = vunpack.c.l.b16 %v107
    %v311 = vunpack.c.h.b16 %v107
    %v312 = vunpack.c.l.b16 %v108
    %v313 = vunpack.c.h.b16 %v108
    %v314 = vunpack.c.l.b16 %v109
    %v315 = vunpack.c.h.b16 %v109
    %v316 = vunpack.c.l.b16 %v110
    %v317 = vunpack.c.h.b16 %v110
    %v318 = vunpack.c.l.b16 %v111
    %v319 = vunpack.c.h.b16 %v111
    %v320 = vunpack.c.l.b16 %v112
    %v321 = vunpack.c.h.b16 %v112
    %v322 = vunpack.c.l.b16 %v113
    %v323 = vunpack.c.h.b16 %v113
    %v324 = vunpack.c.l.b16 %v114
    %v325 = vunpack.c.h.b16 %v114
    %v326 = vpack.c.b16 %v202, %v198
    %v327 = vpack.c.b16 %v203, %v199
    %v328 = vpack.c.b16 %v204, %v200
    %v329 = vpack.c.b16 %v205, %v201
    %v330 = vpack.c.b16 %v210, %v206
    %v331 = vpack.c.b16 %v211, %v207
    %v332 = vpack.c.b16 %v212, %v208
    %v333 = vpack.c.b16 %v213, %v209
    %v334 = vpack.c.b16 %v218, %v214
    %v335 = vpack.c.b16 %v219, %v215
    %v336 = vpack.c.b16 %v220, %v216
    %v337 = vpack.c.b16 %v221, %v217
    %v338 = vpack.c.b16 %v226, %v222
    %v339 = vpack.c.b16 %v227, %v223
    %v340 = vpack.c.b16 %v228, %v224
    %v341 = vpack.c.b16 %v229, %v225
    %v342 = vpack.c.b16 %v234, %v230
    %v343 = vpack.c.b16 %v235, %v231
    %v344 = vpack.c.b16 %v236, %v232
    %v345 = vpack.c.b16 %v237, %v233
    %v346 = vpack.c.b16 %v242, %v238
    %v347 = vpack.c.b16 %v243, %v239
    %v348 = vpack.c.b16 %v244, %v240
    %v349 = vpack.c.b16 %v245, %v241
    %v350 = vpack.c.b16 %v250, %v246
    %v351 = vpack.c.b16 %v251, %v247
    %v352 = vpack.c.b16 %v252, %v248
    %v353 = vpack.c.b16 %v253, %v249
    %v354 = vpack.c.b16 %v258, %v254
    %v355 = vpack.c.b16 %v259, %v255
    %v356 = vpack.c.b16 %v260, %v256
    %v357 = vpack.c.b16 %v261, %v257
    %v358 = vpack.c.b16 %v266, %v262
    %v359 = vpack.c.b16 %v267, %v263
    %v360 = vpack.c.b16 %v268, %v264
    %v361 = vpack.c.b16 %v269, %v265
    %v362 = vpack.c.b16 %v274, %v270
    %v363 = vpack.c.b16 %v275, %v271
    %v364 = vpack.c.b16 %v276, %v272
    %v365 = vpack.c.b16 %v277, %v273
    %v366 = vpack.c.b16 %v282, %v278
    %v367 = vpack.c.b16 %v283, %v279
    %v368 = vpack.c.b16 %v284, %v280
    %v369 = vpack.c.b16 %v285, %v281
    %v370 = vpack.c.b16 %v290, %v286
    %v371 = vpack.c.b16 %v291, %v287
    %v372 = vpack.c.b16 %v292, %v288
    %v373 = vpack.c.b16 %v293, %v289
    %v374 = vpack.c.b16 %v298, %v294
    %v375 = vpack.c.b16 %v299, %v295
    %v376 = vpack.c.b16 %v300, %v296
    %v377 = vpack.c.b16 %v301, %v297
    %v378 = vpack.c.b16 %v306, %v302
    %v379 = vpack.c.b16 %v307, %v303
    %v380 = vpack.c.b16 %v308, %v304
    %v381 = vpack.c.b16 %v309, %v305
    %v382 = vpack.c.b16 %v314, %v310
    %v383 = vpack.c.b16 %v315, %v311
    %v384 = vpack.c.b16 %v316, %v312
    %v385 = vpack.c.b16 %v317, %v313
    %v386 = vpack.c.b16 %v322, %v318
    %v387 = vpack.c.b16 %v323, %v319
    %v388 = vpack.c.b16 %v324, %v320
    %v389 = vpack.c.b16 %v325, %v321
    %454 = vmatpush.bf16.msra.mxu0 %v354
    %455 = vmatpush.bf16.msra.mxu0 %v350
    %456 = vmatpush.bf16.msra.mxu0 %v346
    %457 = vmatpush.bf16.msra.mxu0 %v342
    %458 = vmatpush.bf16.msra.mxu0 %v338
    %459 = vmatpush.bf16.msra.mxu0 %v334
    %460 = vmatpush.bf16.msra.mxu0 %v330
    %461 = vmatpush.bf16.msra.mxu0 %v326
    %462 = vmatmul.bf16.gmra.mxu0 0
    %v463 = vpop.f32.mrf.mxu0
    %v464 = vadd.f32 0.0, %v463
    %v465 = vpop.f32.mrf.mxu0
    %466 = vdwg.mxu0
    %467 = vmatpush.bf16.msra.mxu0 %v386
    %468 = vmatpush.bf16.msra.mxu0 %v382
    %469 = vmatpush.bf16.msra.mxu0 %v378
    %470 = vmatpush.bf16.msra.mxu0 %v374
    %471 = vmatpush.bf16.msra.mxu0 %v370
    %472 = vmatpush.bf16.msra.mxu0 %v366
    %473 = vmatpush.bf16.msra.mxu0 %v362
    %474 = vmatpush.bf16.msra.mxu0 %v358
    %475 = vmatmul.bf16.gmra.mxu0 %v133
    %v476 = vpop.f32.mrf.mxu0
    %v477 = vadd.f32 %v464, %v476
    %v478 = vpop.f32.mrf.mxu0
    %479 = vdwg.mxu0
    %480 = vmatpush.bf16.msra.mxu0 %v355
    %481 = vmatpush.bf16.msra.mxu0 %v351
    %482 = vmatpush.bf16.msra.mxu0 %v347
    %483 = vmatpush.bf16.msra.mxu0 %v343
    %484 = vmatpush.bf16.msra.mxu0 %v339
    %485 = vmatpush.bf16.msra.mxu0 %v335
    %486 = vmatpush.bf16.msra.mxu0 %v331
    %487 = vmatpush.bf16.msra.mxu0 %v327
    %488 = vmatmul.bf16.gmra.mxu0 0
    %v489 = vpop.f32.mrf.mxu0
    %v490 = vadd.f32 0.0, %v489
    %v491 = vpop.f32.mrf.mxu0
    %492 = vdwg.mxu0
    %493 = vmatpush.bf16.msra.mxu0 %v387
    %494 = vmatpush.bf16.msra.mxu0 %v383
    %495 = vmatpush.bf16.msra.mxu0 %v379
    %496 = vmatpush.bf16.msra.mxu0 %v375
    %497 = vmatpush.bf16.msra.mxu0 %v371
    %498 = vmatpush.bf16.msra.mxu0 %v367
    %499 = vmatpush.bf16.msra.mxu0 %v363
    %500 = vmatpush.bf16.msra.mxu0 %v359
    %501 = vmatmul.bf16.gmra.mxu0 %v133
    %v502 = vpop.f32.mrf.mxu0
    %v503 = vadd.f32 %v490, %v502
    %v504 = vpop.f32.mrf.mxu0
    %505 = vdwg.mxu0
    %506 = vmatpush.bf16.msra.mxu0 %v356
    %507 = vmatpush.bf16.msra.mxu0 %v352
    %508 = vmatpush.bf16.msra.mxu0 %v348
    %509 = vmatpush.bf16.msra.mxu0 %v344
    %510 = vmatpush.bf16.msra.mxu0 %v340
    %511 = vmatpush.bf16.msra.mxu0 %v336
    %512 = vmatpush.bf16.msra.mxu0 %v332
    %513 = vmatpush.bf16.msra.mxu0 %v328
    %514 = vmatmul.bf16.gmra.mxu0 0
    %v515 = vpop.f32.mrf.mxu0
    %v516 = vadd.f32 0.0, %v515
    %v517 = vpop.f32.mrf.mxu0
    %518 = vdwg.mxu0
    %519 = vmatpush.bf16.msra.mxu0 %v388
    %520 = vmatpush.bf16.msra.mxu0 %v384
    %521 = vmatpush.bf16.msra.mxu0 %v380
    %522 = vmatpush.bf16.msra.mxu0 %v376
    %523 = vmatpush.bf16.msra.mxu0 %v372
    %524 = vmatpush.bf16.msra.mxu0 %v368
    %525 = vmatpush.bf16.msra.mxu0 %v364
    %526 = vmatpush.bf16.msra.mxu0 %v360
    %527 = vmatmul.bf16.gmra.mxu0 %v133
    %v528 = vpop.f32.mrf.mxu0
    %v529 = vadd.f32 %v516, %v528
    %v530 = vpop.f32.mrf.mxu0
    %531 = vdwg.mxu0
    %532 = vmatpush.bf16.msra.mxu0 %v357
    %533 = vmatpush.bf16.msra.mxu0 %v353
    %534 = vmatpush.bf16.msra.mxu0 %v349
    %535 = vmatpush.bf16.msra.mxu0 %v345
    %536 = vmatpush.bf16.msra.mxu0 %v341
    %537 = vmatpush.bf16.msra.mxu0 %v337
    %538 = vmatpush.bf16.msra.mxu0 %v333
    %539 = vmatpush.bf16.msra.mxu0 %v329
    %540 = vmatmul.bf16.gmra.mxu0 0
    %v541 = vpop.f32.mrf.mxu0
    %v542 = vadd.f32 0.0, %v541
    %v543 = vpop.f32.mrf.mxu0
    %544 = vdwg.mxu0
    %545 = vmatpush.bf16.msra.mxu0 %v389
    %546 = vmatpush.bf16.msra.mxu0 %v385
    %547 = vmatpush.bf16.msra.mxu0 %v381
    %548 = vmatpush.bf16.msra.mxu0 %v377
    %549 = vmatpush.bf16.msra.mxu0 %v373
    %550 = vmatpush.bf16.msra.mxu0 %v369
    %551 = vmatpush.bf16.msra.mxu0 %v365
    %552 = vmatpush.bf16.msra.mxu0 %v361
    %553 = vmatmul.bf16.gmra.mxu0 %v133
    %v554 = vpop.f32.mrf.mxu0
    %v555 = vadd.f32 %v542, %v554
    %v556 = vpop.f32.mrf.mxu0
    %557 = vdwg.mxu0
    %v558 = vpack.c.bf16 %v503, %v477
    %v559 = vpack.c.bf16 %v555, %v529
    %v560 = vxor.u32 %v558, 2147516416
    %v561 = vxor.u32 %v559, 2147516416
    %v562 = vunpack.c.l.bf16 %v560
    %v563 = vunpack.c.h.bf16 %v560
    %v564 = vunpack.c.l.bf16 %v561
    %v565 = vmul.f32 %v562, 1.442695
    %v566 = vpow.pop %v565
    %v567 = vmul.f32 %v563, 1.442695
    %v568 = vpow.pop %v567
    %v569 = vmul.f32 %v564, 1.442695
    %v570 = vpow.pop %v569
    %v571 = vpack.c.bf16 %v568, %v566
    %v572 = vpack.c.bf16 %v570, %v570
    %v573 = vunpack.c.l.bf16 %v571
    %v574 = vunpack.c.h.bf16 %v571
    %v575 = vunpack.c.l.bf16 %v572
    %v576 = vadd.f32 %v573, 1.0
    %v577 = vadd.f32 %v574, 1.0
    %v578 = vadd.f32 %v575, 1.0
    %v579 = vpack.c.bf16 %v577, %v576
    %v580 = vpack.c.bf16 %v578, %v578
    %v581 = vunpack.c.h.bf16 1065369472
    %v582 = vunpack.c.l.bf16 1065369472
    %v583 = vunpack.c.h.bf16 %v579
    %v584 = vunpack.c.l.bf16 %v579
    %v585 = vrcp.pop %v583
    %v586 = vmul.f32 %v581, %v585
    %v587 = vrcp.pop %v584
    %v588 = vmul.f32 %v582, %v587
    %v589 = vpack.c.bf16 %v586, %v588
    %v590 = vunpack.c.h.bf16 %v580
    %v591 = vunpack.c.l.bf16 %v580
    %v592 = vrcp.pop %v590
    %v593 = vmul.f32 %v581, %v592
    %v594 = vrcp.pop %v591
    %v595 = vmul.f32 %v582, %v594
    %v596 = vpack.c.bf16 %v593, %v595
    %v598 = vrot.slane %v559, 4
    %v600 = vunpack.c.l.bf16 %v598
    %v601 = vtanh.pop %v600
    %v602 = vpack.c.bf16 %v601, %v601
    %v604 = vrot.slane %v589, 4
    %v606 = vunpack.c.l.bf16 %v604
    %v607 = vmul.f32 %v606, 0.0
    %v608 = vunpack.c.l.bf16 %v589
    %v609 = vunpack.c.l.bf16 %v602
    %v610 = vmul.f32 %v608, %v609
    %v611 = vadd.f32 %v607, %v610
    %v612 = vtanh.pop %v611
    %v613 = vpack.c.bf16 %v612, %v612
    %v614 = vunpack.c.l.bf16 %v596
    %v615 = vunpack.c.l.bf16 %v613
    %v616 = vmul.f32 %v614, %v615
    %v617 = vpack.c.bf16 %v616, %v616
    %618 = vset.pattern.permute.xlu0 1
    %619 = vperm.xlu0 %618, %v116
    %v620 = vpop.permute.xlu0 %619
    %v623 = vunpack.c.l.s4 839922192
    %v624 = vunpack.c.0.s8 %v623
    %v625 = vperm.slane %v620, %v624
    %v626 = vsel %vm132, %v625, %v121
    %627 = vmatpush.bf16.msra.mxu0 %v354
    %628 = vmatpush.bf16.msra.mxu0 %v350
    %629 = vmatpush.bf16.msra.mxu0 %v346
    %630 = vmatpush.bf16.msra.mxu0 %v342
    %631 = vmatpush.bf16.msra.mxu0 %v338
    %632 = vmatpush.bf16.msra.mxu0 %v334
    %633 = vmatpush.bf16.msra.mxu0 %v330
    %634 = vmatpush.bf16.msra.mxu0 %v326
    %635 = vmatmul.bf16.gmra.mxu0 %v617
    %v636 = vpop.f32.mrf.mxu0
    %v637 = vadd.f32 0.0, %v636
    %v638 = vpop.f32.mrf.mxu0
    %639 = vdwg.mxu0
    %640 = vmatpush.bf16.msra.mxu0 %v386
    %641 = vmatpush.bf16.msra.mxu0 %v382
    %642 = vmatpush.bf16.msra.mxu0 %v378
    %643 = vmatpush.bf16.msra.mxu0 %v374
    %644 = vmatpush.bf16.msra.mxu0 %v370
    %645 = vmatpush.bf16.msra.mxu0 %v366
    %646 = vmatpush.bf16.msra.mxu0 %v362
    %647 = vmatpush.bf16.msra.mxu0 %v358
    %648 = vmatmul.bf16.gmra.mxu0 %v626
    %v649 = vpop.f32.mrf.mxu0
    %v650 = vadd.f32 %v637, %v649
    %v651 = vpop.f32.mrf.mxu0
    %652 = vdwg.mxu0
    %653 = vmatpush.bf16.msra.mxu0 %v355
    %654 = vmatpush.bf16.msra.mxu0 %v351
    %655 = vmatpush.bf16.msra.mxu0 %v347
    %656 = vmatpush.bf16.msra.mxu0 %v343
    %657 = vmatpush.bf16.msra.mxu0 %v339
    %658 = vmatpush.bf16.msra.mxu0 %v335
    %659 = vmatpush.bf16.msra.mxu0 %v331
    %660 = vmatpush.bf16.msra.mxu0 %v327
    %661 = vmatmul.bf16.gmra.mxu0 %v617
    %v662 = vpop.f32.mrf.mxu0
    %v663 = vadd.f32 0.0, %v662
    %v664 = vpop.f32.mrf.mxu0
    %665 = vdwg.mxu0
    %666 = vmatpush.bf16.msra.mxu0 %v387
    %667 = vmatpush.bf16.msra.mxu0 %v383
    %668 = vmatpush.bf16.msra.mxu0 %v379
    %669 = vmatpush.bf16.msra.mxu0 %v375
    %670 = vmatpush.bf16.msra.mxu0 %v371
    %671 = vmatpush.bf16.msra.mxu0 %v367
    %672 = vmatpush.bf16.msra.mxu0 %v363
    %673 = vmatpush.bf16.msra.mxu0 %v359
    %674 = vmatmul.bf16.gmra.mxu0 %v626
    %v675 = vpop.f32.mrf.mxu0
    %v676 = vadd.f32 %v663, %v675
    %v677 = vpop.f32.mrf.mxu0
    %678 = vdwg.mxu0
    %679 = vmatpush.bf16.msra.mxu0 %v356
    %680 = vmatpush.bf16.msra.mxu0 %v352
    %681 = vmatpush.bf16.msra.mxu0 %v348
    %682 = vmatpush.bf16.msra.mxu0 %v344
    %683 = vmatpush.bf16.msra.mxu0 %v340
    %684 = vmatpush.bf16.msra.mxu0 %v336
    %685 = vmatpush.bf16.msra.mxu0 %v332
    %686 = vmatpush.bf16.msra.mxu0 %v328
    %687 = vmatmul.bf16.gmra.mxu0 %v617
    %v688 = vpop.f32.mrf.mxu0
    %v689 = vadd.f32 0.0, %v688
    %v690 = vpop.f32.mrf.mxu0
    %691 = vdwg.mxu0
    %692 = vmatpush.bf16.msra.mxu0 %v388
    %693 = vmatpush.bf16.msra.mxu0 %v384
    %694 = vmatpush.bf16.msra.mxu0 %v380
    %695 = vmatpush.bf16.msra.mxu0 %v376
    %696 = vmatpush.bf16.msra.mxu0 %v372
    %697 = vmatpush.bf16.msra.mxu0 %v368
    %698 = vmatpush.bf16.msra.mxu0 %v364
    %699 = vmatpush.bf16.msra.mxu0 %v360
    %700 = vmatmul.bf16.gmra.mxu0 %v626
    %v701 = vpop.f32.mrf.mxu0
    %v702 = vadd.f32 %v689, %v701
    %v703 = vpop.f32.mrf.mxu0
    %704 = vdwg.mxu0
    %705 = vmatpush.bf16.msra.mxu0 %v357
    %706 = vmatpush.bf16.msra.mxu0 %v353
    %707 = vmatpush.bf16.msra.mxu0 %v349
    %708 = vmatpush.bf16.msra.mxu0 %v345
    %709 = vmatpush.bf16.msra.mxu0 %v341
    %710 = vmatpush.bf16.msra.mxu0 %v337
    %711 = vmatpush.bf16.msra.mxu0 %v333
    %712 = vmatpush.bf16.msra.mxu0 %v329
    %713 = vmatmul.bf16.gmra.mxu0 %v617
    %v714 = vpop.f32.mrf.mxu0
    %v715 = vadd.f32 0.0, %v714
    %v716 = vpop.f32.mrf.mxu0
    %717 = vdwg.mxu0
    %718 = vmatpush.bf16.msra.mxu0 %v389
    %719 = vmatpush.bf16.msra.mxu0 %v385
    %720 = vmatpush.bf16.msra.mxu0 %v381
    %721 = vmatpush.bf16.msra.mxu0 %v377
    %722 = vmatpush.bf16.msra.mxu0 %v373
    %723 = vmatpush.bf16.msra.mxu0 %v369
    %724 = vmatpush.bf16.msra.mxu0 %v365
    %725 = vmatpush.bf16.msra.mxu0 %v361
    %726 = vmatmul.bf16.gmra.mxu0 %v626
    %v727 = vpop.f32.mrf.mxu0
    %v728 = vadd.f32 %v715, %v727
    %v729 = vpop.f32.mrf.mxu0
    %730 = vdwg.mxu0
    %v731 = vpack.c.bf16 %v676, %v650
    %v732 = vpack.c.bf16 %v728, %v702
    %v733 = vxor.u32 %v731, 2147516416
    %v734 = vxor.u32 %v732, 2147516416
    %v735 = vunpack.c.l.bf16 %v733
    %v736 = vunpack.c.h.bf16 %v733
    %v737 = vunpack.c.l.bf16 %v734
    %v738 = vmul.f32 %v735, 1.442695
    %v739 = vpow.pop %v738
    %v740 = vmul.f32 %v736, 1.442695
    %v741 = vpow.pop %v740
    %v742 = vmul.f32 %v737, 1.442695
    %v743 = vpow.pop %v742
    %v744 = vpack.c.bf16 %v741, %v739
    %v745 = vpack.c.bf16 %v743, %v743
    %v746 = vunpack.c.l.bf16 %v744
    %v747 = vunpack.c.h.bf16 %v744
    %v748 = vunpack.c.l.bf16 %v745
    %v749 = vadd.f32 %v746, 1.0
    %v750 = vadd.f32 %v747, 1.0
    %v751 = vadd.f32 %v748, 1.0
    %v752 = vpack.c.bf16 %v750, %v749
    %v753 = vpack.c.bf16 %v751, %v751
    %v754 = vunpack.c.h.bf16 %v752
    %v755 = vunpack.c.l.bf16 %v752
    %v756 = vrcp.pop %v754
    %v757 = vmul.f32 %v581, %v756
    %v758 = vrcp.pop %v755
    %v759 = vmul.f32 %v582, %v758
    %v760 = vpack.c.bf16 %v757, %v759
    %v761 = vunpack.c.h.bf16 %v753
    %v762 = vunpack.c.l.bf16 %v753
    %v763 = vrcp.pop %v761
    %v764 = vmul.f32 %v581, %v763
    %v765 = vrcp.pop %v762
    %v766 = vmul.f32 %v582, %v765
    %v767 = vpack.c.bf16 %v764, %v766
    %v769 = vrot.slane %v732, 4
    %v771 = vunpack.c.l.bf16 %v769
    %v772 = vtanh.pop %v771
    %v773 = vpack.c.bf16 %v772, %v772
    %v775 = vrot.slane %v760, 4
    %v777 = vunpack.c.l.bf16 %v775
    %v778 = vmul.f32 %v777, %v611
    %v779 = vunpack.c.l.bf16 %v760
    %v780 = vunpack.c.l.bf16 %v773
    %v781 = vmul.f32 %v779, %v780
    %v782 = vadd.f32 %v778, %v781
    %v783 = vtanh.pop %v782
    %v784 = vpack.c.bf16 %v783, %v783
    %v785 = vunpack.c.l.bf16 %v767
    %v786 = vunpack.c.l.bf16 %v784
    %v787 = vmul.f32 %v785, %v786
    %v788 = vpack.c.bf16 %v787, %v787
    %789 = vset.pattern.permute.xlu0 2
    %790 = vperm.xlu0 %789, %v116
    %v791 = vpop.permute.xlu0 %790
    %v794 = vunpack.c.l.s4 839922192
    %v795 = vunpack.c.0.s8 %v794
    %v796 = vperm.slane %v791, %v795
    %v797 = vsel %vm132, %v796, %v121
    %798 = vmatpush.bf16.msra.mxu0 %v354
    %799 = vmatpush.bf16.msra.mxu0 %v350
    %800 = vmatpush.bf16.msra.mxu0 %v346
    %801 = vmatpush.bf16.msra.mxu0 %v342
    %802 = vmatpush.bf16.msra.mxu0 %v338
    %803 = vmatpush.bf16.msra.mxu0 %v334
    %804 = vmatpush.bf16.msra.mxu0 %v330
    %805 = vmatpush.bf16.msra.mxu0 %v326
    %806 = vmatmul.bf16.gmra.mxu0 %v788
    %v807 = vpop.f32.mrf.mxu0
    %v808 = vadd.f32 0.0, %v807
    %v809 = vpop.f32.mrf.mxu0
    %810 = vdwg.mxu0
    %811 = vmatpush.bf16.msra.mxu0 %v386
    %812 = vmatpush.bf16.msra.mxu0 %v382
    %813 = vmatpush.bf16.msra.mxu0 %v378
    %814 = vmatpush.bf16.msra.mxu0 %v374
    %815 = vmatpush.bf16.msra.mxu0 %v370
    %816 = vmatpush.bf16.msra.mxu0 %v366
    %817 = vmatpush.bf16.msra.mxu0 %v362
    %818 = vmatpush.bf16.msra.mxu0 %v358
    %819 = vmatmul.bf16.gmra.mxu0 %v797
    %v820 = vpop.f32.mrf.mxu0
    %v821 = vadd.f32 %v808, %v820
    %v822 = vpop.f32.mrf.mxu0
    %823 = vdwg.mxu0
    %824 = vmatpush.bf16.msra.mxu0 %v355
    %825 = vmatpush.bf16.msra.mxu0 %v351
    %826 = vmatpush.bf16.msra.mxu0 %v347
    %827 = vmatpush.bf16.msra.mxu0 %v343
    %828 = vmatpush.bf16.msra.mxu0 %v339
    %829 = vmatpush.bf16.msra.mxu0 %v335
    %830 = vmatpush.bf16.msra.mxu0 %v331
    %831 = vmatpush.bf16.msra.mxu0 %v327
    %832 = vmatmul.bf16.gmra.mxu0 %v788
    %v833 = vpop.f32.mrf.mxu0
    %v834 = vadd.f32 0.0, %v833
    %v835 = vpop.f32.mrf.mxu0
    %836 = vdwg.mxu0
    %837 = vmatpush.bf16.msra.mxu0 %v387
    %838 = vmatpush.bf16.msra.mxu0 %v383
    %839 = vmatpush.bf16.msra.mxu0 %v379
    %840 = vmatpush.bf16.msra.mxu0 %v375
    %841 = vmatpush.bf16.msra.mxu0 %v371
    %842 = vmatpush.bf16.msra.mxu0 %v367
    %843 = vmatpush.bf16.msra.mxu0 %v363
    %844 = vmatpush.bf16.msra.mxu0 %v359
    %845 = vmatmul.bf16.gmra.mxu0 %v797
    %v846 = vpop.f32.mrf.mxu0
    %v847 = vadd.f32 %v834, %v846
    %v848 = vpop.f32.mrf.mxu0
    %849 = vdwg.mxu0
    %850 = vmatpush.bf16.msra.mxu0 %v356
    %851 = vmatpush.bf16.msra.mxu0 %v352
    %852 = vmatpush.bf16.msra.mxu0 %v348
    %853 = vmatpush.bf16.msra.mxu0 %v344
    %854 = vmatpush.bf16.msra.mxu0 %v340
    %855 = vmatpush.bf16.msra.mxu0 %v336
    %856 = vmatpush.bf16.msra.mxu0 %v332
    %857 = vmatpush.bf16.msra.mxu0 %v328
    %858 = vmatmul.bf16.gmra.mxu0 %v788
    %v859 = vpop.f32.mrf.mxu0
    %v860 = vadd.f32 0.0, %v859
    %v861 = vpop.f32.mrf.mxu0
    %862 = vdwg.mxu0
    %863 = vmatpush.bf16.msra.mxu0 %v388
    %864 = vmatpush.bf16.msra.mxu0 %v384
    %865 = vmatpush.bf16.msra.mxu0 %v380
    %866 = vmatpush.bf16.msra.mxu0 %v376
    %867 = vmatpush.bf16.msra.mxu0 %v372
    %868 = vmatpush.bf16.msra.mxu0 %v368
    %869 = vmatpush.bf16.msra.mxu0 %v364
    %870 = vmatpush.bf16.msra.mxu0 %v360
    %871 = vmatmul.bf16.gmra.mxu0 %v797
    %v872 = vpop.f32.mrf.mxu0
    %v873 = vadd.f32 %v860, %v872
    %v874 = vpop.f32.mrf.mxu0
    %875 = vdwg.mxu0
    %876 = vmatpush.bf16.msra.mxu0 %v357
    %877 = vmatpush.bf16.msra.mxu0 %v353
    %878 = vmatpush.bf16.msra.mxu0 %v349
    %879 = vmatpush.bf16.msra.mxu0 %v345
    %880 = vmatpush.bf16.msra.mxu0 %v341
    %881 = vmatpush.bf16.msra.mxu0 %v337
    %882 = vmatpush.bf16.msra.mxu0 %v333
    %883 = vmatpush.bf16.msra.mxu0 %v329
    %884 = vmatmul.bf16.gmra.mxu0 %v788
    %v885 = vpop.f32.mrf.mxu0
    %v886 = vadd.f32 0.0, %v885
    %v887 = vpop.f32.mrf.mxu0
    %888 = vdwg.mxu0
    %889 = vmatpush.bf16.msra.mxu0 %v389
    %890 = vmatpush.bf16.msra.mxu0 %v385
    %891 = vmatpush.bf16.msra.mxu0 %v381
    %892 = vmatpush.bf16.msra.mxu0 %v377
    %893 = vmatpush.bf16.msra.mxu0 %v373
    %894 = vmatpush.bf16.msra.mxu0 %v369
    %895 = vmatpush.bf16.msra.mxu0 %v365
    %896 = vmatpush.bf16.msra.mxu0 %v361
    %897 = vmatmul.bf16.gmra.mxu0 %v797
    %v898 = vpop.f32.mrf.mxu0
    %v899 = vadd.f32 %v886, %v898
    %v900 = vpop.f32.mrf.mxu0
    %901 = vdwg.mxu0
    %v902 = vpack.c.bf16 %v847, %v821
    %v903 = vpack.c.bf16 %v899, %v873
    %v904 = vxor.u32 %v902, 2147516416
    %v905 = vxor.u32 %v903, 2147516416
    %v906 = vunpack.c.l.bf16 %v904
    %v907 = vunpack.c.h.bf16 %v904
    %v908 = vunpack.c.l.bf16 %v905
    %v909 = vmul.f32 %v906, 1.442695
    %v910 = vpow.pop %v909
    %v911 = vmul.f32 %v907, 1.442695
    %v912 = vpow.pop %v911
    %v913 = vmul.f32 %v908, 1.442695
    %v914 = vpow.pop %v913
    %v915 = vpack.c.bf16 %v912, %v910
    %v916 = vpack.c.bf16 %v914, %v914
    %v917 = vunpack.c.l.bf16 %v915
    %v918 = vunpack.c.h.bf16 %v915
    %v919 = vunpack.c.l.bf16 %v916
    %v920 = vadd.f32 %v917, 1.0
    %v921 = vadd.f32 %v918, 1.0
    %v922 = vadd.f32 %v919, 1.0
    %v923 = vpack.c.bf16 %v921, %v920
    %v924 = vpack.c.bf16 %v922, %v922
    %v925 = vunpack.c.h.bf16 %v923
    %v926 = vunpack.c.l.bf16 %v923
    %v927 = vrcp.pop %v925
    %v928 = vmul.f32 %v581, %v927
    %v929 = vrcp.pop %v926
    %v930 = vmul.f32 %v582, %v929
    %v931 = vpack.c.bf16 %v928, %v930
    %v932 = vunpack.c.h.bf16 %v924
    %v933 = vunpack.c.l.bf16 %v924
    %v934 = vrcp.pop %v932
    %v935 = vmul.f32 %v581, %v934
    %v936 = vrcp.pop %v933
    %v937 = vmul.f32 %v582, %v936
    %v938 = vpack.c.bf16 %v935, %v937
    %v940 = vrot.slane %v903, 4
    %v942 = vunpack.c.l.bf16 %v940
    %v943 = vtanh.pop %v942
    %v944 = vpack.c.bf16 %v943, %v943
    %v946 = vrot.slane %v931, 4
    %v948 = vunpack.c.l.bf16 %v946
    %v949 = vmul.f32 %v948, %v782
    %v950 = vunpack.c.l.bf16 %v931
    %v951 = vunpack.c.l.bf16 %v944
    %v952 = vmul.f32 %v950, %v951
    %v953 = vadd.f32 %v949, %v952
    %v954 = vtanh.pop %v953
    %v955 = vpack.c.bf16 %v954, %v954
    %v956 = vunpack.c.l.bf16 %v938
    %v957 = vunpack.c.l.bf16 %v955
    %v958 = vmul.f32 %v956, %v957
    %v959 = vpack.c.bf16 %v958, %v958
    %960 = vset.pattern.permute.xlu0 3
    %961 = vperm.xlu0 %960, %v116
    %v962 = vpop.permute.xlu0 %961
    %v965 = vunpack.c.l.s4 839922192
    %v966 = vunpack.c.0.s8 %v965
    %v967 = vperm.slane %v962, %v966
    %v968 = vsel %vm132, %v967, %v121
    %969 = vmatpush.bf16.msra.mxu0 %v354
    %970 = vmatpush.bf16.msra.mxu0 %v350
    %971 = vmatpush.bf16.msra.mxu0 %v346
    %972 = vmatpush.bf16.msra.mxu0 %v342
    %973 = vmatpush.bf16.msra.mxu0 %v338
    %974 = vmatpush.bf16.msra.mxu0 %v334
    %975 = vmatpush.bf16.msra.mxu0 %v330
    %976 = vmatpush.bf16.msra.mxu0 %v326
    %977 = vmatmul.bf16.gmra.mxu0 %v959
    %v978 = vpop.f32.mrf.mxu0
    %v979 = vadd.f32 0.0, %v978
    %v980 = vpop.f32.mrf.mxu0
    %981 = vdwg.mxu0
    %982 = vmatpush.bf16.msra.mxu0 %v386
    %983 = vmatpush.bf16.msra.mxu0 %v382
    %984 = vmatpush.bf16.msra.mxu0 %v378
    %985 = vmatpush.bf16.msra.mxu0 %v374
    %986 = vmatpush.bf16.msra.mxu0 %v370
    %987 = vmatpush.bf16.msra.mxu0 %v366
    %988 = vmatpush.bf16.msra.mxu0 %v362
    %989 = vmatpush.bf16.msra.mxu0 %v358
    %990 = vmatmul.bf16.gmra.mxu0 %v968
    %v991 = vpop.f32.mrf.mxu0
    %v992 = vadd.f32 %v979, %v991
    %v993 = vpop.f32.mrf.mxu0
    %994 = vdwg.mxu0
    %995 = vmatpush.bf16.msra.mxu0 %v355
    %996 = vmatpush.bf16.msra.mxu0 %v351
    %997 = vmatpush.bf16.msra.mxu0 %v347
    %998 = vmatpush.bf16.msra.mxu0 %v343
    %999 = vmatpush.bf16.msra.mxu0 %v339
    %1000 = vmatpush.bf16.msra.mxu0 %v335
    %1001 = vmatpush.bf16.msra.mxu0 %v331
    %1002 = vmatpush.bf16.msra.mxu0 %v327
    %1003 = vmatmul.bf16.gmra.mxu0 %v959
    %v1004 = vpop.f32.mrf.mxu0
    %v1005 = vadd.f32 0.0, %v1004
    %v1006 = vpop.f32.mrf.mxu0
    %1007 = vdwg.mxu0
    %1008 = vmatpush.bf16.msra.mxu0 %v387
    %1009 = vmatpush.bf16.msra.mxu0 %v383
    %1010 = vmatpush.bf16.msra.mxu0 %v379
    %1011 = vmatpush.bf16.msra.mxu0 %v375
    %1012 = vmatpush.bf16.msra.mxu0 %v371
    %1013 = vmatpush.bf16.msra.mxu0 %v367
    %1014 = vmatpush.bf16.msra.mxu0 %v363
    %1015 = vmatpush.bf16.msra.mxu0 %v359
    %1016 = vmatmul.bf16.gmra.mxu0 %v968
    %v1017 = vpop.f32.mrf.mxu0
    %v1018 = vadd.f32 %v1005, %v1017
    %v1019 = vpop.f32.mrf.mxu0
    %1020 = vdwg.mxu0
    %1021 = vmatpush.bf16.msra.mxu0 %v356
    %1022 = vmatpush.bf16.msra.mxu0 %v352
    %1023 = vmatpush.bf16.msra.mxu0 %v348
    %1024 = vmatpush.bf16.msra.mxu0 %v344
    %1025 = vmatpush.bf16.msra.mxu0 %v340
    %1026 = vmatpush.bf16.msra.mxu0 %v336
    %1027 = vmatpush.bf16.msra.mxu0 %v332
    %1028 = vmatpush.bf16.msra.mxu0 %v328
    %1029 = vmatmul.bf16.gmra.mxu0 %v959
    %v1030 = vpop.f32.mrf.mxu0
    %v1031 = vadd.f32 0.0, %v1030
    %v1032 = vpop.f32.mrf.mxu0
    %1033 = vdwg.mxu0
    %1034 = vmatpush.bf16.msra.mxu0 %v388
    %1035 = vmatpush.bf16.msra.mxu0 %v384
    %1036 = vmatpush.bf16.msra.mxu0 %v380
    %1037 = vmatpush.bf16.msra.mxu0 %v376
    %1038 = vmatpush.bf16.msra.mxu0 %v372
    %1039 = vmatpush.bf16.msra.mxu0 %v368
    %1040 = vmatpush.bf16.msra.mxu0 %v364
    %1041 = vmatpush.bf16.msra.mxu0 %v360
    %1042 = vmatmul.bf16.gmra.mxu0 %v968
    %v1043 = vpop.f32.mrf.mxu0
    %v1044 = vadd.f32 %v1031, %v1043
    %v1045 = vpop.f32.mrf.mxu0
    %1046 = vdwg.mxu0
    %1047 = vmatpush.bf16.msra.mxu0 %v357
    %1048 = vmatpush.bf16.msra.mxu0 %v353
    %1049 = vmatpush.bf16.msra.mxu0 %v349
    %1050 = vmatpush.bf16.msra.mxu0 %v345
    %1051 = vmatpush.bf16.msra.mxu0 %v341
    %1052 = vmatpush.bf16.msra.mxu0 %v337
    %1053 = vmatpush.bf16.msra.mxu0 %v333
    %1054 = vmatpush.bf16.msra.mxu0 %v329
    %1055 = vmatmul.bf16.gmra.mxu0 %v959
    %v1056 = vpop.f32.mrf.mxu0
    %v1057 = vadd.f32 0.0, %v1056
    %v1058 = vpop.f32.mrf.mxu0
    %1059 = vdwg.mxu0
    %1060 = vmatpush.bf16.msra.mxu0 %v389
    %1061 = vmatpush.bf16.msra.mxu0 %v385
    %1062 = vmatpush.bf16.msra.mxu0 %v381
    %1063 = vmatpush.bf16.msra.mxu0 %v377
    %1064 = vmatpush.bf16.msra.mxu0 %v373
    %1065 = vmatpush.bf16.msra.mxu0 %v369
    %1066 = vmatpush.bf16.msra.mxu0 %v365
    %1067 = vmatpush.bf16.msra.mxu0 %v361
    %1068 = vmatmul.bf16.gmra.mxu0 %v968
    %v1069 = vpop.f32.mrf.mxu0
    %v1070 = vadd.f32 %v1057, %v1069
    %v1071 = vpop.f32.mrf.mxu0
    %1072 = vdwg.mxu0
    %v1073 = vpack.c.bf16 %v1018, %v992
    %v1074 = vpack.c.bf16 %v1070, %v1044
    %v1075 = vxor.u32 %v1073, 2147516416
    %v1076 = vxor.u32 %v1074, 2147516416
    %v1077 = vunpack.c.l.bf16 %v1075
    %v1078 = vunpack.c.h.bf16 %v1075
    %v1079 = vunpack.c.l.bf16 %v1076
    %v1080 = vmul.f32 %v1077, 1.442695
    %v1081 = vpow.pop %v1080
    %v1082 = vmul.f32 %v1078, 1.442695
    %v1083 = vpow.pop %v1082
    %v1084 = vmul.f32 %v1079, 1.442695
    %v1085 = vpow.pop %v1084
    %v1086 = vpack.c.bf16 %v1083, %v1081
    %v1087 = vpack.c.bf16 %v1085, %v1085
    %v1088 = vunpack.c.l.bf16 %v1086
    %v1089 = vunpack.c.h.bf16 %v1086
    %v1090 = vunpack.c.l.bf16 %v1087
    %v1091 = vadd.f32 %v1088, 1.0
    %v1092 = vadd.f32 %v1089, 1.0
    %v1093 = vadd.f32 %v1090, 1.0
    %v1094 = vpack.c.bf16 %v1092, %v1091
    %v1095 = vpack.c.bf16 %v1093, %v1093
    %v1096 = vunpack.c.h.bf16 %v1094
    %v1097 = vunpack.c.l.bf16 %v1094
    %v1098 = vrcp.pop %v1096
    %v1099 = vmul.f32 %v581, %v1098
    %v1100 = vrcp.pop %v1097
    %v1101 = vmul.f32 %v582, %v1100
    %v1102 = vpack.c.bf16 %v1099, %v1101
    %v1103 = vunpack.c.h.bf16 %v1095
    %v1104 = vunpack.c.l.bf16 %v1095
    %v1105 = vrcp.pop %v1103
    %v1106 = vmul.f32 %v581, %v1105
    %v1107 = vrcp.pop %v1104
    %v1108 = vmul.f32 %v582, %v1107
    %v1109 = vpack.c.bf16 %v1106, %v1108
    %v1111 = vrot.slane %v1074, 4
    %v1113 = vunpack.c.l.bf16 %v1111
    %v1114 = vtanh.pop %v1113
    %v1115 = vpack.c.bf16 %v1114, %v1114
    %v1117 = vrot.slane %v1102, 4
    %v1119 = vunpack.c.l.bf16 %v1117
    %v1120 = vmul.f32 %v1119, %v953
    %v1121 = vunpack.c.l.bf16 %v1102
    %v1122 = vunpack.c.l.bf16 %v1115
    %v1123 = vmul.f32 %v1121, %v1122
    %v1124 = vadd.f32 %v1120, %v1123
    %v1125 = vtanh.pop %v1124
    %v1126 = vpack.c.bf16 %v1125, %v1125
    %v1127 = vunpack.c.l.bf16 %v1109
    %v1128 = vunpack.c.l.bf16 %v1126
    %v1129 = vmul.f32 %v1127, %v1128
    %v1130 = vpack.c.bf16 %v1129, %v1129
    %1131 = vset.pattern.permute.xlu0 4
    %1132 = vperm.xlu0 %1131, %v116
    %v1133 = vpop.permute.xlu0 %1132
    %v1136 = vunpack.c.l.s4 839922192
    %v1137 = vunpack.c.0.s8 %v1136
    %v1138 = vperm.slane %v1133, %v1137
    %v1139 = vsel %vm132, %v1138, %v121
    %1140 = vmatpush.bf16.msra.mxu0 %v354
    %1141 = vmatpush.bf16.msra.mxu0 %v350
    %1142 = vmatpush.bf16.msra.mxu0 %v346
    %1143 = vmatpush.bf16.msra.mxu0 %v342
    %1144 = vmatpush.bf16.msra.mxu0 %v338
    %1145 = vmatpush.bf16.msra.mxu0 %v334
    %1146 = vmatpush.bf16.msra.mxu0 %v330
    %1147 = vmatpush.bf16.msra.mxu0 %v326
    %1148 = vmatmul.bf16.gmra.mxu0 %v1130
    %v1149 = vpop.f32.mrf.mxu0
    %v1150 = vadd.f32 0.0, %v1149
    %v1151 = vpop.f32.mrf.mxu0
    %1152 = vdwg.mxu0
    %1153 = vmatpush.bf16.msra.mxu0 %v386
    %1154 = vmatpush.bf16.msra.mxu0 %v382
    %1155 = vmatpush.bf16.msra.mxu0 %v378
    %1156 = vmatpush.bf16.msra.mxu0 %v374
    %1157 = vmatpush.bf16.msra.mxu0 %v370
    %1158 = vmatpush.bf16.msra.mxu0 %v366
    %1159 = vmatpush.bf16.msra.mxu0 %v362
    %1160 = vmatpush.bf16.msra.mxu0 %v358
    %1161 = vmatmul.bf16.gmra.mxu0 %v1139
    %v1162 = vpop.f32.mrf.mxu0
    %v1163 = vadd.f32 %v1150, %v1162
    %v1164 = vpop.f32.mrf.mxu0
    %1165 = vdwg.mxu0
    %1166 = vmatpush.bf16.msra.mxu0 %v355
    %1167 = vmatpush.bf16.msra.mxu0 %v351
    %1168 = vmatpush.bf16.msra.mxu0 %v347
    %1169 = vmatpush.bf16.msra.mxu0 %v343
    %1170 = vmatpush.bf16.msra.mxu0 %v339
    %1171 = vmatpush.bf16.msra.mxu0 %v335
    %1172 = vmatpush.bf16.msra.mxu0 %v331
    %1173 = vmatpush.bf16.msra.mxu0 %v327
    %1174 = vmatmul.bf16.gmra.mxu0 %v1130
    %v1175 = vpop.f32.mrf.mxu0
    %v1176 = vadd.f32 0.0, %v1175
    %v1177 = vpop.f32.mrf.mxu0
    %1178 = vdwg.mxu0
    %1179 = vmatpush.bf16.msra.mxu0 %v387
    %1180 = vmatpush.bf16.msra.mxu0 %v383
    %1181 = vmatpush.bf16.msra.mxu0 %v379
    %1182 = vmatpush.bf16.msra.mxu0 %v375
    %1183 = vmatpush.bf16.msra.mxu0 %v371
    %1184 = vmatpush.bf16.msra.mxu0 %v367
    %1185 = vmatpush.bf16.msra.mxu0 %v363
    %1186 = vmatpush.bf16.msra.mxu0 %v359
    %1187 = vmatmul.bf16.gmra.mxu0 %v1139
    %v1188 = vpop.f32.mrf.mxu0
    %v1189 = vadd.f32 %v1176, %v1188
    %v1190 = vpop.f32.mrf.mxu0
    %1191 = vdwg.mxu0
    %1192 = vmatpush.bf16.msra.mxu0 %v356
    %1193 = vmatpush.bf16.msra.mxu0 %v352
    %1194 = vmatpush.bf16.msra.mxu0 %v348
    %1195 = vmatpush.bf16.msra.mxu0 %v344
    %1196 = vmatpush.bf16.msra.mxu0 %v340
    %1197 = vmatpush.bf16.msra.mxu0 %v336
    %1198 = vmatpush.bf16.msra.mxu0 %v332
    %1199 = vmatpush.bf16.msra.mxu0 %v328
    %1200 = vmatmul.bf16.gmra.mxu0 %v1130
    %v1201 = vpop.f32.mrf.mxu0
    %v1202 = vadd.f32 0.0, %v1201
    %v1203 = vpop.f32.mrf.mxu0
    %1204 = vdwg.mxu0
    %1205 = vmatpush.bf16.msra.mxu0 %v388
    %1206 = vmatpush.bf16.msra.mxu0 %v384
    %1207 = vmatpush.bf16.msra.mxu0 %v380
    %1208 = vmatpush.bf16.msra.mxu0 %v376
    %1209 = vmatpush.bf16.msra.mxu0 %v372
    %1210 = vmatpush.bf16.msra.mxu0 %v368
    %1211 = vmatpush.bf16.msra.mxu0 %v364
    %1212 = vmatpush.bf16.msra.mxu0 %v360
    %1213 = vmatmul.bf16.gmra.mxu0 %v1139
    %v1214 = vpop.f32.mrf.mxu0
    %v1215 = vadd.f32 %v1202, %v1214
    %v1216 = vpop.f32.mrf.mxu0
    %1217 = vdwg.mxu0
    %1218 = vmatpush.bf16.msra.mxu0 %v357
    %1219 = vmatpush.bf16.msra.mxu0 %v353
    %1220 = vmatpush.bf16.msra.mxu0 %v349
    %1221 = vmatpush.bf16.msra.mxu0 %v345
    %1222 = vmatpush.bf16.msra.mxu0 %v341
    %1223 = vmatpush.bf16.msra.mxu0 %v337
    %1224 = vmatpush.bf16.msra.mxu0 %v333
    %1225 = vmatpush.bf16.msra.mxu0 %v329
    %1226 = vmatmul.bf16.gmra.mxu0 %v1130
    %v1227 = vpop.f32.mrf.mxu0
    %v1228 = vadd.f32 0.0, %v1227
    %v1229 = vpop.f32.mrf.mxu0
    %1230 = vdwg.mxu0
    %1231 = vmatpush.bf16.msra.mxu0 %v389
    %1232 = vmatpush.bf16.msra.mxu0 %v385
    %1233 = vmatpush.bf16.msra.mxu0 %v381
    %1234 = vmatpush.bf16.msra.mxu0 %v377
    %1235 = vmatpush.bf16.msra.mxu0 %v373
    %1236 = vmatpush.bf16.msra.mxu0 %v369
    %1237 = vmatpush.bf16.msra.mxu0 %v365
    %1238 = vmatpush.bf16.msra.mxu0 %v361
    %1239 = vmatmul.bf16.gmra.mxu0 %v1139
    %v1240 = vpop.f32.mrf.mxu0
    %v1241 = vadd.f32 %v1228, %v1240
    %v1242 = vpop.f32.mrf.mxu0
    %1243 = vdwg.mxu0
    %v1244 = vpack.c.bf16 %v1189, %v1163
    %v1245 = vpack.c.bf16 %v1241, %v1215
    %v1246 = vxor.u32 %v1244, 2147516416
    %v1247 = vxor.u32 %v1245, 2147516416
    %v1248 = vunpack.c.l.bf16 %v1246
    %v1249 = vunpack.c.h.bf16 %v1246
    %v1250 = vunpack.c.l.bf16 %v1247
    %v1251 = vmul.f32 %v1248, 1.442695
    %v1252 = vpow.pop %v1251
    %v1253 = vmul.f32 %v1249, 1.442695
    %v1254 = vpow.pop %v1253
    %v1255 = vmul.f32 %v1250, 1.442695
    %v1256 = vpow.pop %v1255
    %v1257 = vpack.c.bf16 %v1254, %v1252
    %v1258 = vpack.c.bf16 %v1256, %v1256
    %v1259 = vunpack.c.l.bf16 %v1257
    %v1260 = vunpack.c.h.bf16 %v1257
    %v1261 = vunpack.c.l.bf16 %v1258
    %v1262 = vadd.f32 %v1259, 1.0
    %v1263 = vadd.f32 %v1260, 1.0
    %v1264 = vadd.f32 %v1261, 1.0
    %v1265 = vpack.c.bf16 %v1263, %v1262
    %v1266 = vpack.c.bf16 %v1264, %v1264
    %v1267 = vunpack.c.h.bf16 %v1265
    %v1268 = vunpack.c.l.bf16 %v1265
    %v1269 = vrcp.pop %v1267
    %v1270 = vmul.f32 %v581, %v1269
    %v1271 = vrcp.pop %v1268
    %v1272 = vmul.f32 %v582, %v1271
    %v1273 = vpack.c.bf16 %v1270, %v1272
    %v1274 = vunpack.c.h.bf16 %v1266
    %v1275 = vunpack.c.l.bf16 %v1266
    %v1276 = vrcp.pop %v1274
    %v1277 = vmul.f32 %v581, %v1276
    %v1278 = vrcp.pop %v1275
    %v1279 = vmul.f32 %v582, %v1278
    %v1280 = vpack.c.bf16 %v1277, %v1279
    %v1282 = vrot.slane %v1245, 4
    %v1284 = vunpack.c.l.bf16 %v1282
    %v1285 = vtanh.pop %v1284
    %v1286 = vpack.c.bf16 %v1285, %v1285
    %v1288 = vrot.slane %v1273, 4
    %v1290 = vunpack.c.l.bf16 %v1288
    %v1291 = vmul.f32 %v1290, %v1124
    %v1292 = vunpack.c.l.bf16 %v1273
    %v1293 = vunpack.c.l.bf16 %v1286
    %v1294 = vmul.f32 %v1292, %v1293
    %v1295 = vadd.f32 %v1291, %v1294
    %v1296 = vtanh.pop %v1295
    %v1297 = vpack.c.bf16 %v1296, %v1296
    %v1298 = vunpack.c.l.bf16 %v1280
    %v1299 = vunpack.c.l.bf16 %v1297
    %v1300 = vmul.f32 %v1298, %v1299
    %v1301 = vpack.c.bf16 %v1300, %v1300
    %1302 = vset.pattern.permute.xlu0 5
    %1303 = vperm.xlu0 %1302, %v116
    %v1304 = vpop.permute.xlu0 %1303
    %v1307 = vunpack.c.l.s4 839922192
    %v1308 = vunpack.c.0.s8 %v1307
    %v1309 = vperm.slane %v1304, %v1308
    %v1310 = vsel %vm132, %v1309, %v121
    %1311 = vmatpush.bf16.msra.mxu0 %v354
    %1312 = vmatpush.bf16.msra.mxu0 %v350
    %1313 = vmatpush.bf16.msra.mxu0 %v346
    %1314 = vmatpush.bf16.msra.mxu0 %v342
    %1315 = vmatpush.bf16.msra.mxu0 %v338
    %1316 = vmatpush.bf16.msra.mxu0 %v334
    %1317 = vmatpush.bf16.msra.mxu0 %v330
    %1318 = vmatpush.bf16.msra.mxu0 %v326
    %1319 = vmatmul.bf16.gmra.mxu0 %v1301
    %v1320 = vpop.f32.mrf.mxu0
    %v1321 = vadd.f32 0.0, %v1320
    %v1322 = vpop.f32.mrf.mxu0
    %1323 = vdwg.mxu0
    %1324 = vmatpush.bf16.msra.mxu0 %v386
    %1325 = vmatpush.bf16.msra.mxu0 %v382
    %1326 = vmatpush.bf16.msra.mxu0 %v378
    %1327 = vmatpush.bf16.msra.mxu0 %v374
    %1328 = vmatpush.bf16.msra.mxu0 %v370
    %1329 = vmatpush.bf16.msra.mxu0 %v366
    %1330 = vmatpush.bf16.msra.mxu0 %v362
    %1331 = vmatpush.bf16.msra.mxu0 %v358
    %1332 = vmatmul.bf16.gmra.mxu0 %v1310
    %v1333 = vpop.f32.mrf.mxu0
    %v1334 = vadd.f32 %v1321, %v1333
    %v1335 = vpop.f32.mrf.mxu0
    %1336 = vdwg.mxu0
    %1337 = vmatpush.bf16.msra.mxu0 %v355
    %1338 = vmatpush.bf16.msra.mxu0 %v351
    %1339 = vmatpush.bf16.msra.mxu0 %v347
    %1340 = vmatpush.bf16.msra.mxu0 %v343
    %1341 = vmatpush.bf16.msra.mxu0 %v339
    %1342 = vmatpush.bf16.msra.mxu0 %v335
    %1343 = vmatpush.bf16.msra.mxu0 %v331
    %1344 = vmatpush.bf16.msra.mxu0 %v327
    %1345 = vmatmul.bf16.gmra.mxu0 %v1301
    %v1346 = vpop.f32.mrf.mxu0
    %v1347 = vadd.f32 0.0, %v1346
    %v1348 = vpop.f32.mrf.mxu0
    %1349 = vdwg.mxu0
    %1350 = vmatpush.bf16.msra.mxu0 %v387
    %1351 = vmatpush.bf16.msra.mxu0 %v383
    %1352 = vmatpush.bf16.msra.mxu0 %v379
    %1353 = vmatpush.bf16.msra.mxu0 %v375
    %1354 = vmatpush.bf16.msra.mxu0 %v371
    %1355 = vmatpush.bf16.msra.mxu0 %v367
    %1356 = vmatpush.bf16.msra.mxu0 %v363
    %1357 = vmatpush.bf16.msra.mxu0 %v359
    %1358 = vmatmul.bf16.gmra.mxu0 %v1310
    %v1359 = vpop.f32.mrf.mxu0
    %v1360 = vadd.f32 %v1347, %v1359
    %v1361 = vpop.f32.mrf.mxu0
    %1362 = vdwg.mxu0
    %1363 = vmatpush.bf16.msra.mxu0 %v356
    %1364 = vmatpush.bf16.msra.mxu0 %v352
    %1365 = vmatpush.bf16.msra.mxu0 %v348
    %1366 = vmatpush.bf16.msra.mxu0 %v344
    %1367 = vmatpush.bf16.msra.mxu0 %v340
    %1368 = vmatpush.bf16.msra.mxu0 %v336
    %1369 = vmatpush.bf16.msra.mxu0 %v332
    %1370 = vmatpush.bf16.msra.mxu0 %v328
    %1371 = vmatmul.bf16.gmra.mxu0 %v1301
    %v1372 = vpop.f32.mrf.mxu0
    %v1373 = vadd.f32 0.0, %v1372
    %v1374 = vpop.f32.mrf.mxu0
    %1375 = vdwg.mxu0
    %1376 = vmatpush.bf16.msra.mxu0 %v388
    %1377 = vmatpush.bf16.msra.mxu0 %v384
    %1378 = vmatpush.bf16.msra.mxu0 %v380
    %1379 = vmatpush.bf16.msra.mxu0 %v376
    %1380 = vmatpush.bf16.msra.mxu0 %v372
    %1381 = vmatpush.bf16.msra.mxu0 %v368
    %1382 = vmatpush.bf16.msra.mxu0 %v364
    %1383 = vmatpush.bf16.msra.mxu0 %v360
    %1384 = vmatmul.bf16.gmra.mxu0 %v1310
    %v1385 = vpop.f32.mrf.mxu0
    %v1386 = vadd.f32 %v1373, %v1385
    %v1387 = vpop.f32.mrf.mxu0
    %1388 = vdwg.mxu0
    %1389 = vmatpush.bf16.msra.mxu0 %v357
    %1390 = vmatpush.bf16.msra.mxu0 %v353
    %1391 = vmatpush.bf16.msra.mxu0 %v349
    %1392 = vmatpush.bf16.msra.mxu0 %v345
    %1393 = vmatpush.bf16.msra.mxu0 %v341
    %1394 = vmatpush.bf16.msra.mxu0 %v337
    %1395 = vmatpush.bf16.msra.mxu0 %v333
    %1396 = vmatpush.bf16.msra.mxu0 %v329
    %1397 = vmatmul.bf16.gmra.mxu0 %v1301
    %v1398 = vpop.f32.mrf.mxu0
    %v1399 = vadd.f32 0.0, %v1398
    %v1400 = vpop.f32.mrf.mxu0
    %1401 = vdwg.mxu0
    %1402 = vmatpush.bf16.msra.mxu0 %v389
    %1403 = vmatpush.bf16.msra.mxu0 %v385
    %1404 = vmatpush.bf16.msra.mxu0 %v381
    %1405 = vmatpush.bf16.msra.mxu0 %v377
    %1406 = vmatpush.bf16.msra.mxu0 %v373
    %1407 = vmatpush.bf16.msra.mxu0 %v369
    %1408 = vmatpush.bf16.msra.mxu0 %v365
    %1409 = vmatpush.bf16.msra.mxu0 %v361
    %1410 = vmatmul.bf16.gmra.mxu0 %v1310
    %v1411 = vpop.f32.mrf.mxu0
    %v1412 = vadd.f32 %v1399, %v1411
    %v1413 = vpop.f32.mrf.mxu0
    %1414 = vdwg.mxu0
    %v1415 = vpack.c.bf16 %v1360, %v1334
    %v1416 = vpack.c.bf16 %v1412, %v1386
    %v1417 = vxor.u32 %v1415, 2147516416
    %v1418 = vxor.u32 %v1416, 2147516416
    %v1419 = vunpack.c.l.bf16 %v1417
    %v1420 = vunpack.c.h.bf16 %v1417
    %v1421 = vunpack.c.l.bf16 %v1418
    %v1422 = vmul.f32 %v1419, 1.442695
    %v1423 = vpow.pop %v1422
    %v1424 = vmul.f32 %v1420, 1.442695
    %v1425 = vpow.pop %v1424
    %v1426 = vmul.f32 %v1421, 1.442695
    %v1427 = vpow.pop %v1426
    %v1428 = vpack.c.bf16 %v1425, %v1423
    %v1429 = vpack.c.bf16 %v1427, %v1427
    %v1430 = vunpack.c.l.bf16 %v1428
    %v1431 = vunpack.c.h.bf16 %v1428
    %v1432 = vunpack.c.l.bf16 %v1429
    %v1433 = vadd.f32 %v1430, 1.0
    %v1434 = vadd.f32 %v1431, 1.0
    %v1435 = vadd.f32 %v1432, 1.0
    %v1436 = vpack.c.bf16 %v1434, %v1433
    %v1437 = vpack.c.bf16 %v1435, %v1435
    %v1438 = vunpack.c.h.bf16 %v1436
    %v1439 = vunpack.c.l.bf16 %v1436
    %v1440 = vrcp.pop %v1438
    %v1441 = vmul.f32 %v581, %v1440
    %v1442 = vrcp.pop %v1439
    %v1443 = vmul.f32 %v582, %v1442
    %v1444 = vpack.c.bf16 %v1441, %v1443
    %v1445 = vunpack.c.h.bf16 %v1437
    %v1446 = vunpack.c.l.bf16 %v1437
    %v1447 = vrcp.pop %v1445
    %v1448 = vmul.f32 %v581, %v1447
    %v1449 = vrcp.pop %v1446
    %v1450 = vmul.f32 %v582, %v1449
    %v1451 = vpack.c.bf16 %v1448, %v1450
    %v1453 = vrot.slane %v1416, 4
    %v1455 = vunpack.c.l.bf16 %v1453
    %v1456 = vtanh.pop %v1455
    %v1457 = vpack.c.bf16 %v1456, %v1456
    %v1459 = vrot.slane %v1444, 4
    %v1461 = vunpack.c.l.bf16 %v1459
    %v1462 = vmul.f32 %v1461, %v1295
    %v1463 = vunpack.c.l.bf16 %v1444
    %v1464 = vunpack.c.l.bf16 %v1457
    %v1465 = vmul.f32 %v1463, %v1464
    %v1466 = vadd.f32 %v1462, %v1465
    %v1467 = vtanh.pop %v1466
    %v1468 = vpack.c.bf16 %v1467, %v1467
    %v1469 = vunpack.c.l.bf16 %v1451
    %v1470 = vunpack.c.l.bf16 %v1468
    %v1471 = vmul.f32 %v1469, %v1470
    %v1472 = vpack.c.bf16 %v1471, %v1471
    %1473 = vset.pattern.permute.xlu0 6
    %1474 = vperm.xlu0 %1473, %v116
    %v1475 = vpop.permute.xlu0 %1474
    %v1478 = vunpack.c.l.s4 839922192
    %v1479 = vunpack.c.0.s8 %v1478
    %v1480 = vperm.slane %v1475, %v1479
    %v1481 = vsel %vm132, %v1480, %v121
    %1482 = vmatpush.bf16.msra.mxu0 %v354
    %1483 = vmatpush.bf16.msra.mxu0 %v350
    %1484 = vmatpush.bf16.msra.mxu0 %v346
    %1485 = vmatpush.bf16.msra.mxu0 %v342
    %1486 = vmatpush.bf16.msra.mxu0 %v338
    %1487 = vmatpush.bf16.msra.mxu0 %v334
    %1488 = vmatpush.bf16.msra.mxu0 %v330
    %1489 = vmatpush.bf16.msra.mxu0 %v326
    %1490 = vmatmul.bf16.gmra.mxu0 %v1472
    %v1491 = vpop.f32.mrf.mxu0
    %v1492 = vadd.f32 0.0, %v1491
    %v1493 = vpop.f32.mrf.mxu0
    %1494 = vdwg.mxu0
    %1495 = vmatpush.bf16.msra.mxu0 %v386
    %1496 = vmatpush.bf16.msra.mxu0 %v382
    %1497 = vmatpush.bf16.msra.mxu0 %v378
    %1498 = vmatpush.bf16.msra.mxu0 %v374
    %1499 = vmatpush.bf16.msra.mxu0 %v370
    %1500 = vmatpush.bf16.msra.mxu0 %v366
    %1501 = vmatpush.bf16.msra.mxu0 %v362
    %1502 = vmatpush.bf16.msra.mxu0 %v358
    %1503 = vmatmul.bf16.gmra.mxu0 %v1481
    %v1504 = vpop.f32.mrf.mxu0
    %v1505 = vadd.f32 %v1492, %v1504
    %v1506 = vpop.f32.mrf.mxu0
    %1507 = vdwg.mxu0
    %1508 = vmatpush.bf16.msra.mxu0 %v355
    %1509 = vmatpush.bf16.msra.mxu0 %v351
    %1510 = vmatpush.bf16.msra.mxu0 %v347
    %1511 = vmatpush.bf16.msra.mxu0 %v343
    %1512 = vmatpush.bf16.msra.mxu0 %v339
    %1513 = vmatpush.bf16.msra.mxu0 %v335
    %1514 = vmatpush.bf16.msra.mxu0 %v331
    %1515 = vmatpush.bf16.msra.mxu0 %v327
    %1516 = vmatmul.bf16.gmra.mxu0 %v1472
    %v1517 = vpop.f32.mrf.mxu0
    %v1518 = vadd.f32 0.0, %v1517
    %v1519 = vpop.f32.mrf.mxu0
    %1520 = vdwg.mxu0
    %1521 = vmatpush.bf16.msra.mxu0 %v387
    %1522 = vmatpush.bf16.msra.mxu0 %v383
    %1523 = vmatpush.bf16.msra.mxu0 %v379
    %1524 = vmatpush.bf16.msra.mxu0 %v375
    %1525 = vmatpush.bf16.msra.mxu0 %v371
    %1526 = vmatpush.bf16.msra.mxu0 %v367
    %1527 = vmatpush.bf16.msra.mxu0 %v363
    %1528 = vmatpush.bf16.msra.mxu0 %v359
    %1529 = vmatmul.bf16.gmra.mxu0 %v1481
    %v1530 = vpop.f32.mrf.mxu0
    %v1531 = vadd.f32 %v1518, %v1530
    %v1532 = vpop.f32.mrf.mxu0
    %1533 = vdwg.mxu0
    %1534 = vmatpush.bf16.msra.mxu0 %v356
    %1535 = vmatpush.bf16.msra.mxu0 %v352
    %1536 = vmatpush.bf16.msra.mxu0 %v348
    %1537 = vmatpush.bf16.msra.mxu0 %v344
    %1538 = vmatpush.bf16.msra.mxu0 %v340
    %1539 = vmatpush.bf16.msra.mxu0 %v336
    %1540 = vmatpush.bf16.msra.mxu0 %v332
    %1541 = vmatpush.bf16.msra.mxu0 %v328
    %1542 = vmatmul.bf16.gmra.mxu0 %v1472
    %v1543 = vpop.f32.mrf.mxu0
    %v1544 = vadd.f32 0.0, %v1543
    %v1545 = vpop.f32.mrf.mxu0
    %1546 = vdwg.mxu0
    %1547 = vmatpush.bf16.msra.mxu0 %v388
    %1548 = vmatpush.bf16.msra.mxu0 %v384
    %1549 = vmatpush.bf16.msra.mxu0 %v380
    %1550 = vmatpush.bf16.msra.mxu0 %v376
    %1551 = vmatpush.bf16.msra.mxu0 %v372
    %1552 = vmatpush.bf16.msra.mxu0 %v368
    %1553 = vmatpush.bf16.msra.mxu0 %v364
    %1554 = vmatpush.bf16.msra.mxu0 %v360
    %1555 = vmatmul.bf16.gmra.mxu0 %v1481
    %v1556 = vpop.f32.mrf.mxu0
    %v1557 = vadd.f32 %v1544, %v1556
    %v1558 = vpop.f32.mrf.mxu0
    %1559 = vdwg.mxu0
    %1560 = vmatpush.bf16.msra.mxu0 %v357
    %1561 = vmatpush.bf16.msra.mxu0 %v353
    %1562 = vmatpush.bf16.msra.mxu0 %v349
    %1563 = vmatpush.bf16.msra.mxu0 %v345
    %1564 = vmatpush.bf16.msra.mxu0 %v341
    %1565 = vmatpush.bf16.msra.mxu0 %v337
    %1566 = vmatpush.bf16.msra.mxu0 %v333
    %1567 = vmatpush.bf16.msra.mxu0 %v329
    %1568 = vmatmul.bf16.gmra.mxu0 %v1472
    %v1569 = vpop.f32.mrf.mxu0
    %v1570 = vadd.f32 0.0, %v1569
    %v1571 = vpop.f32.mrf.mxu0
    %1572 = vdwg.mxu0
    %1573 = vmatpush.bf16.msra.mxu0 %v389
    %1574 = vmatpush.bf16.msra.mxu0 %v385
    %1575 = vmatpush.bf16.msra.mxu0 %v381
    %1576 = vmatpush.bf16.msra.mxu0 %v377
    %1577 = vmatpush.bf16.msra.mxu0 %v373
    %1578 = vmatpush.bf16.msra.mxu0 %v369
    %1579 = vmatpush.bf16.msra.mxu0 %v365
    %1580 = vmatpush.bf16.msra.mxu0 %v361
    %1581 = vmatmul.bf16.gmra.mxu0 %v1481
    %v1582 = vpop.f32.mrf.mxu0
    %v1583 = vadd.f32 %v1570, %v1582
    %v1584 = vpop.f32.mrf.mxu0
    %1585 = vdwg.mxu0
    %v1586 = vpack.c.bf16 %v1531, %v1505
    %v1587 = vpack.c.bf16 %v1583, %v1557
    %v1588 = vxor.u32 %v1586, 2147516416
    %v1589 = vxor.u32 %v1587, 2147516416
    %v1590 = vunpack.c.l.bf16 %v1588
    %v1591 = vunpack.c.h.bf16 %v1588
    %v1592 = vunpack.c.l.bf16 %v1589
    %v1593 = vmul.f32 %v1590, 1.442695
    %v1594 = vpow.pop %v1593
    %v1595 = vmul.f32 %v1591, 1.442695
    %v1596 = vpow.pop %v1595
    %v1597 = vmul.f32 %v1592, 1.442695
    %v1598 = vpow.pop %v1597
    %v1599 = vpack.c.bf16 %v1596, %v1594
    %v1600 = vpack.c.bf16 %v1598, %v1598
    %v1601 = vunpack.c.l.bf16 %v1599
    %v1602 = vunpack.c.h.bf16 %v1599
    %v1603 = vunpack.c.l.bf16 %v1600
    %v1604 = vadd.f32 %v1601, 1.0
    %v1605 = vadd.f32 %v1602, 1.0
    %v1606 = vadd.f32 %v1603, 1.0
    %v1607 = vpack.c.bf16 %v1605, %v1604
    %v1608 = vpack.c.bf16 %v1606, %v1606
    %v1609 = vunpack.c.h.bf16 %v1607
    %v1610 = vunpack.c.l.bf16 %v1607
    %v1611 = vrcp.pop %v1609
    %v1612 = vmul.f32 %v581, %v1611
    %v1613 = vrcp.pop %v1610
    %v1614 = vmul.f32 %v582, %v1613
    %v1615 = vpack.c.bf16 %v1612, %v1614
    %v1616 = vunpack.c.h.bf16 %v1608
    %v1617 = vunpack.c.l.bf16 %v1608
    %v1618 = vrcp.pop %v1616
    %v1619 = vmul.f32 %v581, %v1618
    %v1620 = vrcp.pop %v1617
    %v1621 = vmul.f32 %v582, %v1620
    %v1622 = vpack.c.bf16 %v1619, %v1621
    %v1624 = vrot.slane %v1587, 4
    %v1626 = vunpack.c.l.bf16 %v1624
    %v1627 = vtanh.pop %v1626
    %v1628 = vpack.c.bf16 %v1627, %v1627
    %v1630 = vrot.slane %v1615, 4
    %v1632 = vunpack.c.l.bf16 %v1630
    %v1633 = vmul.f32 %v1632, %v1466
    %v1634 = vunpack.c.l.bf16 %v1615
    %v1635 = vunpack.c.l.bf16 %v1628
    %v1636 = vmul.f32 %v1634, %v1635
    %v1637 = vadd.f32 %v1633, %v1636
    %v1638 = vtanh.pop %v1637
    %v1639 = vpack.c.bf16 %v1638, %v1638
    %v1640 = vunpack.c.l.bf16 %v1622
    %v1641 = vunpack.c.l.bf16 %v1639
    %v1642 = vmul.f32 %v1640, %v1641
    %v1643 = vpack.c.bf16 %v1642, %v1642
    %1644 = vset.pattern.permute.xlu0 7
    %1645 = vperm.xlu0 %1644, %v116
    %v1646 = vpop.permute.xlu0 %1645
    %v1649 = vunpack.c.l.s4 839922192
    %v1650 = vunpack.c.0.s8 %v1649
    %v1651 = vperm.slane %v1646, %v1650
    %v1652 = vsel %vm132, %v1651, %v121
    %1653 = vmatpush.bf16.msra.mxu0 %v354
    %1654 = vmatpush.bf16.msra.mxu0 %v350
    %1655 = vmatpush.bf16.msra.mxu0 %v346
    %1656 = vmatpush.bf16.msra.mxu0 %v342
    %1657 = vmatpush.bf16.msra.mxu0 %v338
    %1658 = vmatpush.bf16.msra.mxu0 %v334
    %1659 = vmatpush.bf16.msra.mxu0 %v330
    %1660 = vmatpush.bf16.msra.mxu0 %v326
    %1661 = vmatmul.bf16.gmra.mxu0 %v1643
    %v1662 = vpop.f32.mrf.mxu0
    %v1663 = vadd.f32 0.0, %v1662
    %v1664 = vpop.f32.mrf.mxu0
    %1665 = vdwg.mxu0
    %1666 = vmatpush.bf16.msra.mxu0 %v386
    %1667 = vmatpush.bf16.msra.mxu0 %v382
    %1668 = vmatpush.bf16.msra.mxu0 %v378
    %1669 = vmatpush.bf16.msra.mxu0 %v374
    %1670 = vmatpush.bf16.msra.mxu0 %v370
    %1671 = vmatpush.bf16.msra.mxu0 %v366
    %1672 = vmatpush.bf16.msra.mxu0 %v362
    %1673 = vmatpush.bf16.msra.mxu0 %v358
    %1674 = vmatmul.bf16.gmra.mxu0 %v1652
    %v1675 = vpop.f32.mrf.mxu0
    %v1676 = vadd.f32 %v1663, %v1675
    %v1677 = vpop.f32.mrf.mxu0
    %1678 = vdwg.mxu0
    %1679 = vmatpush.bf16.msra.mxu0 %v355
    %1680 = vmatpush.bf16.msra.mxu0 %v351
    %1681 = vmatpush.bf16.msra.mxu0 %v347
    %1682 = vmatpush.bf16.msra.mxu0 %v343
    %1683 = vmatpush.bf16.msra.mxu0 %v339
    %1684 = vmatpush.bf16.msra.mxu0 %v335
    %1685 = vmatpush.bf16.msra.mxu0 %v331
    %1686 = vmatpush.bf16.msra.mxu0 %v327
    %1687 = vmatmul.bf16.gmra.mxu0 %v1643
    %v1688 = vpop.f32.mrf.mxu0
    %v1689 = vadd.f32 0.0, %v1688
    %v1690 = vpop.f32.mrf.mxu0
    %1691 = vdwg.mxu0
    %1692 = vmatpush.bf16.msra.mxu0 %v387
    %1693 = vmatpush.bf16.msra.mxu0 %v383
    %1694 = vmatpush.bf16.msra.mxu0 %v379
    %1695 = vmatpush.bf16.msra.mxu0 %v375
    %1696 = vmatpush.bf16.msra.mxu0 %v371
    %1697 = vmatpush.bf16.msra.mxu0 %v367
    %1698 = vmatpush.bf16.msra.mxu0 %v363
    %1699 = vmatpush.bf16.msra.mxu0 %v359
    %1700 = vmatmul.bf16.gmra.mxu0 %v1652
    %v1701 = vpop.f32.mrf.mxu0
    %v1702 = vadd.f32 %v1689, %v1701
    %v1703 = vpop.f32.mrf.mxu0
    %1704 = vdwg.mxu0
    %1705 = vmatpush.bf16.msra.mxu0 %v356
    %1706 = vmatpush.bf16.msra.mxu0 %v352
    %1707 = vmatpush.bf16.msra.mxu0 %v348
    %1708 = vmatpush.bf16.msra.mxu0 %v344
    %1709 = vmatpush.bf16.msra.mxu0 %v340
    %1710 = vmatpush.bf16.msra.mxu0 %v336
    %1711 = vmatpush.bf16.msra.mxu0 %v332
    %1712 = vmatpush.bf16.msra.mxu0 %v328
    %1713 = vmatmul.bf16.gmra.mxu0 %v1643
    %v1714 = vpop.f32.mrf.mxu0
    %v1715 = vadd.f32 0.0, %v1714
    %v1716 = vpop.f32.mrf.mxu0
    %1717 = vdwg.mxu0
    %1718 = vmatpush.bf16.msra.mxu0 %v388
    %1719 = vmatpush.bf16.msra.mxu0 %v384
    %1720 = vmatpush.bf16.msra.mxu0 %v380
    %1721 = vmatpush.bf16.msra.mxu0 %v376
    %1722 = vmatpush.bf16.msra.mxu0 %v372
    %1723 = vmatpush.bf16.msra.mxu0 %v368
    %1724 = vmatpush.bf16.msra.mxu0 %v364
    %1725 = vmatpush.bf16.msra.mxu0 %v360
    %1726 = vmatmul.bf16.gmra.mxu0 %v1652
    %v1727 = vpop.f32.mrf.mxu0
    %v1728 = vadd.f32 %v1715, %v1727
    %v1729 = vpop.f32.mrf.mxu0
    %1730 = vdwg.mxu0
    %1731 = vmatpush.bf16.msra.mxu0 %v357
    %1732 = vmatpush.bf16.msra.mxu0 %v353
    %1733 = vmatpush.bf16.msra.mxu0 %v349
    %1734 = vmatpush.bf16.msra.mxu0 %v345
    %1735 = vmatpush.bf16.msra.mxu0 %v341
    %1736 = vmatpush.bf16.msra.mxu0 %v337
    %1737 = vmatpush.bf16.msra.mxu0 %v333
    %1738 = vmatpush.bf16.msra.mxu0 %v329
    %1739 = vmatmul.bf16.gmra.mxu0 %v1643
    %v1740 = vpop.f32.mrf.mxu0
    %v1741 = vadd.f32 0.0, %v1740
    %v1742 = vpop.f32.mrf.mxu0
    %1743 = vdwg.mxu0
    %1744 = vmatpush.bf16.msra.mxu0 %v389
    %1745 = vmatpush.bf16.msra.mxu0 %v385
    %1746 = vmatpush.bf16.msra.mxu0 %v381
    %1747 = vmatpush.bf16.msra.mxu0 %v377
    %1748 = vmatpush.bf16.msra.mxu0 %v373
    %1749 = vmatpush.bf16.msra.mxu0 %v369
    %1750 = vmatpush.bf16.msra.mxu0 %v365
    %1751 = vmatpush.bf16.msra.mxu0 %v361
    %1752 = vmatmul.bf16.gmra.mxu0 %v1652
    %v1753 = vpop.f32.mrf.mxu0
    %v1754 = vadd.f32 %v1741, %v1753
    %v1755 = vpop.f32.mrf.mxu0
    %1756 = vdwg.mxu0
    %v1757 = vpack.c.bf16 %v1702, %v1676
    %v1758 = vpack.c.bf16 %v1754, %v1728
    %v1759 = vxor.u32 %v1757, 2147516416
    %v1760 = vxor.u32 %v1758, 2147516416
    %v1761 = vunpack.c.l.bf16 %v1759
    %v1762 = vunpack.c.h.bf16 %v1759
    %v1763 = vunpack.c.l.bf16 %v1760
    %v1764 = vmul.f32 %v1761, 1.442695
    %v1765 = vpow.pop %v1764
    %v1766 = vmul.f32 %v1762, 1.442695
    %v1767 = vpow.pop %v1766
    %v1768 = vmul.f32 %v1763, 1.442695
    %v1769 = vpow.pop %v1768
    %v1770 = vpack.c.bf16 %v1767, %v1765
    %v1771 = vpack.c.bf16 %v1769, %v1769
    %v1772 = vunpack.c.l.bf16 %v1770
    %v1773 = vunpack.c.h.bf16 %v1770
    %v1774 = vunpack.c.l.bf16 %v1771
    %v1775 = vadd.f32 %v1772, 1.0
    %v1776 = vadd.f32 %v1773, 1.0
    %v1777 = vadd.f32 %v1774, 1.0
    %v1778 = vpack.c.bf16 %v1776, %v1775
    %v1779 = vpack.c.bf16 %v1777, %v1777
    %v1780 = vunpack.c.h.bf16 %v1778
    %v1781 = vunpack.c.l.bf16 %v1778
    %v1782 = vrcp.pop %v1780
    %v1783 = vmul.f32 %v581, %v1782
    %v1784 = vrcp.pop %v1781
    %v1785 = vmul.f32 %v582, %v1784
    %v1786 = vpack.c.bf16 %v1783, %v1785
    %v1787 = vunpack.c.h.bf16 %v1779
    %v1788 = vunpack.c.l.bf16 %v1779
    %v1789 = vrcp.pop %v1787
    %v1790 = vmul.f32 %v581, %v1789
    %v1791 = vrcp.pop %v1788
    %v1792 = vmul.f32 %v582, %v1791
    %v1793 = vpack.c.bf16 %v1790, %v1792
    %v1795 = vrot.slane %v1758, 4
    %v1797 = vunpack.c.l.bf16 %v1795
    %v1798 = vtanh.pop %v1797
    %v1799 = vpack.c.bf16 %v1798, %v1798
    %v1801 = vrot.slane %v1786, 4
    %v1803 = vunpack.c.l.bf16 %v1801
    %v1804 = vmul.f32 %v1803, %v1637
    %v1805 = vunpack.c.l.bf16 %v1786
    %v1806 = vunpack.c.l.bf16 %v1799
    %v1807 = vmul.f32 %v1805, %v1806
    %v1808 = vadd.f32 %v1804, %v1807
    %v1809 = vtanh.pop %v1808
    %v1810 = vunpack.c.l.bf16 %v1793
    %v1811 = vmul.f32 %v1810, %v1809
    %v1812 = vld [vmem:[%s2] sm:$0x1]
    %v1814 = vperm.slane %v1812, 0
    %v1816 = vmul.f32 %v1811, %v1814
    %1817 = vadd.xlane.f32.xlu0 %v1816
    %v1818 = vpop.xlane.xlu0 %1817
    %v1819 = vld [vmem:[#allocation2] sm:$0x1]
    %v1821 = vperm.slane %v1819, 0
    %v1823 = vadd.f32 %v1818, %v1821
    %vm1824 = vcmask 7168
    %1825 = vst.msk [vmem:[%s4] sm:$0xff] %vm1824, %v1823
    // Predicated region
    $region26: #{tpu_custom_call.1} parent=1 // pred_check
      _
    $region27: #{tpu_custom_call.1} parent=1 // pred_check_branch
      %1827 = sbr.rel (0) target = $region29
    $region28: #{tpu_custom_call.1} parent=1 // pred_region
      _
    $region29: #{tpu_custom_call.1} parent=1 // pred_fallthru
      _
    // Predicated region
    $region30: #{tpu_custom_call.1} parent=1 // pred_check
      _
    $region31: #{tpu_custom_call.1} parent=1 // pred_check_branch
      %1829 = sbr.rel (0) target = $region33
    $region32: #{tpu_custom_call.1} parent=1 // pred_region
      _
    $region33: #{tpu_custom_call.1} parent=1 // pred_fallthru
      _
    %1830 = vsyncpa [#allocation4], 1
    %1831 = vsyncpa [#allocation6], 1

</llo_original>
